<compile_context>
chip_gen: v6e
topology: v6e:2x2x1
jax: 0.10.0
libtpu: 0.0.40
codegen_flags: <defaults>
</compile_context>

<pallas_src>
import functools

import jax
import jax.numpy as jnp
from jax import lax
from jax.experimental import pallas as pl
from jax.experimental.pallas import tpu as pltpu

EPS = 1e-5  # GroupNorm default eps


def _gelu_exact(x):
    # exact GELU: x * 0.5 * (1 + erf(x / sqrt(2)))
    # erf via Abramowitz & Stegun 7.1.26 (max abs err ~1.5e-7).  The 1/(1+p*z)
    # term uses the EUP approximate reciprocal refined by one Newton step
    # (instead of a VALU divide); exp() is an EUP op as well.
    a1, a2, a3, a4, a5 = 0.254829592, -0.284496736, 1.421413741, -1.453152027, 1.061405429
    p = 0.3275911
    z = x * 0.7071067811865476
    s = jnp.where(z >= 0.0, 1.0, -1.0)
    az = jnp.abs(z)
    d = 1.0 + p * az
    t0 = pl.reciprocal(d, approx=True)
    t = t0 * (2.0 - d * t0)                       # Newton refinement -> ~f32 exact
    poly = ((((a5 * t + a4) * t + a3) * t + a2) * t + a1) * t
    erf = s * (1.0 - poly * jnp.exp(-az * az))
    return 0.5 * x * (1.0 + erf)


def snp_d_kernel(x_ref, dww_ref, dwb_ref, nw_ref, nb_ref,
                 w1_ref, b1_ref, w2_ref, b2_ref, g_ref,
                 o_ref, xpad_ref, *, W, OFF):
    C, HW = x_ref.shape[1], x_ref.shape[2]
    LPAD = xpad_ref.shape[1]

    x = x_ref[0]                                   # (C, HW) = flattened NCHW sample

    # ---- build the zero-padded flat image in VMEM (no padded HBM copy) ----
    # Only the head/tail halo needs zeroing; the interior is overwritten
    # every grid step.  (Unconditional on purpose: see header comment.)
    xpad_ref[:, :OFF] = jnp.zeros((C, OFF), jnp.float32)
    xpad_ref[:, OFF + HW:] = jnp.zeros((C, LPAD - OFF - HW), jnp.float32)
    xpad_ref[:, OFF:OFF + HW] = x
    xpadf = xpad_ref[...]                          # (C, LPAD), lane-dense

    # ---- in-kernel per-kx column-boundary masks (iota + compares, once) ----
    col = lax.broadcasted_iota(jnp.int32, (1, HW), 1)
    if (W & (W - 1)) == 0:
        wcol = col & (W - 1)                       # power-of-two fast path
    else:
        wcol = col % W
    masks = [((wcol >= -dx) & (wcol < W - dx)).astype(jnp.float32)
             for dx in range(-3, 4)]               # masks[kx], dx = kx - 3

    # ---- depthwise 7x7 conv (groups == C) ---------------------------------
    # output lane l = h*W + w ; tap (ky,kx) reads padded lane l + s(ky,kx).
    # Out-of-range rows land in the zero head/tail; out-of-range columns are
    # removed by the per-kx mask (applied once per kx, after the ky sum).
    acc = jnp.zeros((C, HW), jnp.float32)
    for kx in range(7):
        dx = kx - 3
        part = jnp.zeros((C, HW), jnp.float32)
        for ky in range(7):
            s = OFF + (ky - 3) * W + dx            # static, 0 < s < LPAD
            window = pltpu.roll(xpadf, LPAD - s, axis=1)[:, :HW]   # lane shift (XLU)
            tap = dww_ref[:, ky * 7 + kx:ky * 7 + kx + 1]          # (C, 1)
            part = part + window * tap
        if dx == 0:
            acc = acc + part                       # center column: mask == 1
        else:
            acc = acc + part * masks[kx]
    acc = acc + dwb_ref[...]                       # (C, 1) bias

    # ---- GroupNorm(num_groups=1): fused single-pass mean / var ------------
    # (single-pass E[x^2]-E[x]^2 is fine at these magnitudes in f32)
    n = float(C * HW)
    s1 = jnp.sum(acc, keepdims=True)               # (1, 1)
    s2 = jnp.sum(acc * acc, keepdims=True)         # (1, 1)
    mean = s1 / n
    var = s2 / n - mean * mean                     # biased variance
    inv = lax.rsqrt(var + EPS)
    scale = inv * nw_ref[...]                      # (C, 1)
    shift = nb_ref[...] - mean * scale             # (C, 1)  (centering folded in)
    xn = acc * scale + shift

    # ---- pwconv1 (1x1 conv, C -> 4C) + exact GELU --------------------------
    h = jnp.dot(w1_ref[...], xn, preferred_element_type=jnp.float32) + b1_ref[...]
    h = _gelu_exact(h)                             # (4C, HW) lane-dense slab

    # ---- pwconv2 (1x1 conv, 4C -> C) + layer scale + residual --------------
    y = jnp.dot(w2_ref[...], h, preferred_element_type=jnp.float32) + b2_ref[...]
    y = y * g_ref[...]
    o_ref[0] = x + y                               # shortcut reuses the same input


def snp_d_forward(x_nchw, params):
    """x_nchw: (B, C, H, W) float32. Returns (B, C, H, W)."""
    B, C, H, W = x_nchw.shape
    HW = H * W

    # zero-halo offset / padded length for the flattened depthwise conv
    OFF = 64 * (-(-(3 * W + 3) // 64))                 # smallest mult of 64 >= 3W+3
    LPAD = 128 * (-(-(OFF + HW + 3 * W + 3) // 128))   # lane-tile aligned
    assert OFF >= 3 * W + 3                    # halo reads never go negative
    assert OFF + HW + 3 * W + 3 <= LPAD        # no modular wrap on any tap read

    x_flat = x_nchw.reshape(B, C, HW).astype(jnp.float32)      # NCHW flattened, free

    # --- parameter re-layout (glue, channels-first column vectors) ---
    dww = params["dw_w"][:, 0].reshape(C, 49).astype(jnp.float32)  # [c, ky*7+kx]
    dwb = params["dw_b"].reshape(C, 1).astype(jnp.float32)
    nw = params["norm_w"].reshape(C, 1).astype(jnp.float32)
    nb = params["norm_b"].reshape(C, 1).astype(jnp.float32)
    w1 = params["w1"][:, :, 0, 0].astype(jnp.float32)          # (4C, C)
    b1 = params["b1"].reshape(4 * C, 1).astype(jnp.float32)
    w2 = params["w2"][:, :, 0, 0].astype(jnp.float32)          # (C, 4C)
    b2 = params["b2"].reshape(C, 1).astype(jnp.float32)
    g = params["gamma"].reshape(C, 1).astype(jnp.float32)

    kernel = functools.partial(snp_d_kernel, W=W, OFF=OFF)

    out_flat = pl.pallas_call(
        kernel,
        out_shape=jax.ShapeDtypeStruct((B, C, HW), jnp.float32),
        grid_spec=pltpu.PrefetchScalarGridSpec(
            num_scalar_prefetch=0,
            grid=(B,),
            in_specs=[
                pl.BlockSpec((1, C, HW), lambda b: (b, 0, 0)),    # x (also the shortcut)
                pl.BlockSpec((C, 49), lambda b: (0, 0)),          # dw taps (one tile)
                pl.BlockSpec((C, 1), lambda b: (0, 0)),           # dw bias
                pl.BlockSpec((C, 1), lambda b: (0, 0)),           # norm weight
                pl.BlockSpec((C, 1), lambda b: (0, 0)),           # norm bias
                pl.BlockSpec((4 * C, C), lambda b: (0, 0)),       # pwconv1 W
                pl.BlockSpec((4 * C, 1), lambda b: (0, 0)),       # pwconv1 b
                pl.BlockSpec((C, 4 * C), lambda b: (0, 0)),       # pwconv2 W
                pl.BlockSpec((C, 1), lambda b: (0, 0)),           # pwconv2 b
                pl.BlockSpec((C, 1), lambda b: (0, 0)),           # gamma
            ],
            out_specs=pl.BlockSpec((1, C, HW), lambda b: (b, 0, 0)),
            scratch_shapes=[pltpu.VMEM((C, LPAD), jnp.float32)],
        ),
        compiler_params=pltpu.CompilerParams(
            dimension_semantics=("parallel",),
            vmem_limit_bytes=32 * 1024 * 1024,
        ),
    )(x_flat, dww, dwb, nw, nb, w1, b1, w2, b2, g)

    return out_flat.reshape(B, C, H, W)


def snp_d_reference(x, params):
    """Plain-JAX reference (NCHW), mirroring the PyTorch module."""
    B, C, H, W = x.shape
    y = lax.conv_general_dilated(
        x, params["dw_w"], window_strides=(1, 1), padding=((3, 3), (3, 3)),
        dimension_numbers=("NCHW", "OIHW", "NCHW"), feature_group_count=C)
    y = y + params["dw_b"].reshape(1, C, 1, 1)
    mean = jnp.mean(y, axis=(1, 2, 3), keepdims=True)
    var = jnp.mean((y - mean) ** 2, axis=(1, 2, 3), keepdims=True)
    y = (y - mean) * lax.rsqrt(var + EPS)
    y = y * params["norm_w"].reshape(1, C, 1, 1) + params["norm_b"].reshape(1, C, 1, 1)
    h = jnp.einsum("nchw,oc->nohw", y, params["w1"][:, :, 0, 0]) + params["b1"].reshape(1, -1, 1, 1)
    h = jax.nn.gelu(h, approximate=False)
    z = jnp.einsum("nchw,oc->nohw", h, params["w2"][:, :, 0, 0]) + params["b2"].reshape(1, -1, 1, 1)
    z = params["gamma"].reshape(1, -1, 1, 1) * z
    return x + z


if __name__ == "__main__":
    dim, B, H, W = 8, 2, 16, 16

    key = jax.random.PRNGKey(0)
    ks = jax.random.split(key, 9)
    x = jax.random.normal(ks[0], (B, dim, H, W), jnp.float32)

    params = {
        "dw_w": 0.1 * jax.random.normal(ks[1], (dim, 1, 7, 7), jnp.float32),
        "dw_b": 0.1 * jax.random.normal(ks[2], (dim,), jnp.float32),
        "norm_w": 1.0 + 0.1 * jax.random.normal(ks[3], (dim,), jnp.float32),
        "norm_b": 0.1 * jax.random.normal(ks[4], (dim,), jnp.float32),
        "w1": 0.1 * jax.random.normal(ks[5], (4 * dim, dim, 1, 1), jnp.float32),
        "b1": 0.1 * jax.random.normal(ks[6], (4 * dim,), jnp.float32),
        "w2": 0.1 * jax.random.normal(ks[7], (dim, 4 * dim, 1, 1), jnp.float32),
        "b2": jnp.zeros((dim,), jnp.float32),
        # trained-like layer scale (non-trivial, so the branch is actually tested)
        "gamma": 1.0 + 0.1 * jax.random.normal(ks[8], (dim,), jnp.float32),
    }

    out = jax.block_until_ready(snp_d_forward(x, params))
    ref = jax.block_until_ready(snp_d_reference(x, params))

    assert out.shape == x.shape and out.dtype == jnp.float32
    assert jnp.allclose(out, ref, atol=1e-4, rtol=1e-4), float(jnp.max(jnp.abs(out - ref)))
    print("KERNEL_OK")
</pallas_src>

<mosaic_0001>
module attributes {stable_mosaic.version = 11 : i64} {
  func.func @snp_d_kernel(%arg0: i32, %arg1: memref<1x8x256xf32, #tpu.memory_space<vmem>>, %arg2: memref<8x49xf32, #tpu.memory_space<vmem>>, %arg3: memref<8x1xf32, #tpu.memory_space<vmem>>, %arg4: memref<8x1xf32, #tpu.memory_space<vmem>>, %arg5: memref<8x1xf32, #tpu.memory_space<vmem>>, %arg6: memref<32x8xf32, #tpu.memory_space<vmem>>, %arg7: memref<32x1xf32, #tpu.memory_space<vmem>>, %arg8: memref<8x32xf32, #tpu.memory_space<vmem>>, %arg9: memref<8x1xf32, #tpu.memory_space<vmem>>, %arg10: memref<8x1xf32, #tpu.memory_space<vmem>>, %arg11: memref<1x8x256xf32, #tpu.memory_space<vmem>>, %arg12: memref<8x384xf32, #tpu.memory_space<vmem>>) attributes {dimension_semantics = [#tpu.dimension_semantics<parallel>], iteration_bounds = array<i64: 2>, scalar_prefetch = 0 : i64, scratch_operands = 1 : i64, tpu.core_type = #tpu.core_type<tc>, window_params = [{transform_indices = @transform_0, window_bounds = array<i64: 1, 8, 256>}, {pipeline_mode = #tpu.pipeline_mode<synchronous>, transform_indices = @transform_1, window_bounds = array<i64: 8, 49>}, {pipeline_mode = #tpu.pipeline_mode<synchronous>, transform_indices = @transform_2, window_bounds = array<i64: 8, 1>}, {pipeline_mode = #tpu.pipeline_mode<synchronous>, transform_indices = @transform_3, window_bounds = array<i64: 8, 1>}, {pipeline_mode = #tpu.pipeline_mode<synchronous>, transform_indices = @transform_4, window_bounds = array<i64: 8, 1>}, {pipeline_mode = #tpu.pipeline_mode<synchronous>, transform_indices = @transform_5, window_bounds = array<i64: 32, 8>}, {pipeline_mode = #tpu.pipeline_mode<synchronous>, transform_indices = @transform_6, window_bounds = array<i64: 32, 1>}, {pipeline_mode = #tpu.pipeline_mode<synchronous>, transform_indices = @transform_7, window_bounds = array<i64: 8, 32>}, {pipeline_mode = #tpu.pipeline_mode<synchronous>, transform_indices = @transform_8, window_bounds = array<i64: 8, 1>}, {pipeline_mode = #tpu.pipeline_mode<synchronous>, transform_indices = @transform_9, window_bounds = array<i64: 8, 1>}, {transform_indices = @transform_10, window_bounds = array<i64: 1, 8, 256>}]} {
    %c0 = arith.constant 0 : index
    %c0_0 = arith.constant 0 : index
    %c0_1 = arith.constant 0 : index
    %0 = vector.load %arg1[%c0, %c0_0, %c0_1] : memref<1x8x256xf32, #tpu.memory_space<vmem>>, vector<1x8x256xf32>
    %1 = vector.shape_cast %0 : vector<1x8x256xf32> to vector<8x256xf32>
    %cst = arith.constant 0.000000e+00 : f32
    %2 = vector.broadcast %cst : f32 to vector<8x64xf32>
    %c0_2 = arith.constant 0 : index
    %c0_3 = arith.constant 0 : index
    %3 = vector.load %arg12[%c0_2, %c0_3] : memref<8x384xf32, #tpu.memory_space<vmem>>, vector<8x64xf32>
    tpu.vector_store %arg12[%c0_2, %c0_3], %2 {strides = array<i32>} : memref<8x384xf32, #tpu.memory_space<vmem>>, vector<8x64xf32>,
    %cst_4 = arith.constant 0.000000e+00 : f32
    %4 = vector.broadcast %cst_4 : f32 to vector<8x64xf32>
    %c0_5 = arith.constant 0 : index
    %c320 = arith.constant 320 : index
    %5 = vector.load %arg12[%c0_5, %c320] : memref<8x384xf32, #tpu.memory_space<vmem>>, vector<8x64xf32>
    tpu.vector_store %arg12[%c0_5, %c320], %4 {strides = array<i32>} : memref<8x384xf32, #tpu.memory_space<vmem>>, vector<8x64xf32>,
    %c0_6 = arith.constant 0 : index
    %c64 = arith.constant 64 : index
    %6 = vector.load %arg12[%c0_6, %c64] : memref<8x384xf32, #tpu.memory_space<vmem>>, vector<8x256xf32>
    tpu.vector_store %arg12[%c0_6, %c64], %1 {strides = array<i32>} : memref<8x384xf32, #tpu.memory_space<vmem>>, vector<8x256xf32>,
    %c0_7 = arith.constant 0 : index
    %c0_8 = arith.constant 0 : index
    %7 = vector.load %arg12[%c0_7, %c0_8] : memref<8x384xf32, #tpu.memory_space<vmem>>, vector<8x384xf32>
    %8 = tpu.iota {dimensions = array<i32: 1>} : vector<1x256xi32>
    %c15_i32 = arith.constant 15 : i32
    %9 = vector.broadcast %c15_i32 : i32 to vector<1x256xi32>
    %10 = arith.andi %8, %9 : vector<1x256xi32>
    %c3_i32 = arith.constant 3 : i32
    %11 = vector.broadcast %c3_i32 : i32 to vector<1x256xi32>
    %12 = arith.cmpi sge, %10, %11 : vector<1x256xi32>
    %c19_i32 = arith.constant 19 : i32
    %13 = vector.broadcast %c19_i32 : i32 to vector<1x256xi32>
    %14 = arith.cmpi slt, %10, %13 : vector<1x256xi32>
    %15 = arith.andi %12, %14 : vector<1x256xi1>
    %16 = arith.extui %15 : vector<1x256xi1> to vector<1x256xi32>
    %17 = arith.sitofp %16 : vector<1x256xi32> to vector<1x256xf32>
    %c2_i32 = arith.constant 2 : i32
    %18 = vector.broadcast %c2_i32 : i32 to vector<1x256xi32>
    %19 = arith.cmpi sge, %10, %18 : vector<1x256xi32>
    %c18_i32 = arith.constant 18 : i32
    %20 = vector.broadcast %c18_i32 : i32 to vector<1x256xi32>
    %21 = arith.cmpi slt, %10, %20 : vector<1x256xi32>
    %22 = arith.andi %19, %21 : vector<1x256xi1>
    %23 = arith.extui %22 : vector<1x256xi1> to vector<1x256xi32>
    %24 = arith.sitofp %23 : vector<1x256xi32> to vector<1x256xf32>
    %c1_i32 = arith.constant 1 : i32
    %25 = vector.broadcast %c1_i32 : i32 to vector<1x256xi32>
    %26 = arith.cmpi sge, %10, %25 : vector<1x256xi32>
    %c17_i32 = arith.constant 17 : i32
    %27 = vector.broadcast %c17_i32 : i32 to vector<1x256xi32>
    %28 = arith.cmpi slt, %10, %27 : vector<1x256xi32>
    %29 = arith.andi %26, %28 : vector<1x256xi1>
    %30 = arith.extui %29 : vector<1x256xi1> to vector<1x256xi32>
    %31 = arith.sitofp %30 : vector<1x256xi32> to vector<1x256xf32>
    %c-1_i32 = arith.constant -1 : i32
    %32 = vector.broadcast %c-1_i32 : i32 to vector<1x256xi32>
    %33 = arith.cmpi sge, %10, %32 : vector<1x256xi32>
    %c15_i32_9 = arith.constant 15 : i32
    %34 = vector.broadcast %c15_i32_9 : i32 to vector<1x256xi32>
    %35 = arith.cmpi slt, %10, %34 : vector<1x256xi32>
    %36 = arith.andi %33, %35 : vector<1x256xi1>
    %37 = arith.extui %36 : vector<1x256xi1> to vector<1x256xi32>
    %38 = arith.sitofp %37 : vector<1x256xi32> to vector<1x256xf32>
    %c-2_i32 = arith.constant -2 : i32
    %39 = vector.broadcast %c-2_i32 : i32 to vector<1x256xi32>
    %40 = arith.cmpi sge, %10, %39 : vector<1x256xi32>
    %c14_i32 = arith.constant 14 : i32
    %41 = vector.broadcast %c14_i32 : i32 to vector<1x256xi32>
    %42 = arith.cmpi slt, %10, %41 : vector<1x256xi32>
    %43 = arith.andi %40, %42 : vector<1x256xi1>
    %44 = arith.extui %43 : vector<1x256xi1> to vector<1x256xi32>
    %45 = arith.sitofp %44 : vector<1x256xi32> to vector<1x256xf32>
    %c-3_i32 = arith.constant -3 : i32
    %46 = vector.broadcast %c-3_i32 : i32 to vector<1x256xi32>
    %47 = arith.cmpi sge, %10, %46 : vector<1x256xi32>
    %c13_i32 = arith.constant 13 : i32
    %48 = vector.broadcast %c13_i32 : i32 to vector<1x256xi32>
    %49 = arith.cmpi slt, %10, %48 : vector<1x256xi32>
    %50 = arith.andi %47, %49 : vector<1x256xi1>
    %51 = arith.extui %50 : vector<1x256xi1> to vector<1x256xi32>
    %52 = arith.sitofp %51 : vector<1x256xi32> to vector<1x256xf32>
    %cst_10 = arith.constant 0.000000e+00 : f32
    %53 = vector.broadcast %cst_10 : f32 to vector<8x256xf32>
    %cst_11 = arith.constant 0.000000e+00 : f32
    %54 = vector.broadcast %cst_11 : f32 to vector<8x256xf32>
    %c371_i32 = arith.constant 371 : i32
    %55 = tpu.dynamic_rotate %7 by %c371_i32 dim 1 : vector<8x384xf32>, i32 -> vector<8x384xf32>
    %56 = vector.extract_strided_slice %55 {offsets = [0, 0], sizes = [8, 256], strides = [1, 1]} : vector<8x384xf32> to vector<8x256xf32>
    %c0_12 = arith.constant 0 : index
    %c0_13 = arith.constant 0 : index
    %57 = vector.load %arg2[%c0_12, %c0_13] : memref<8x49xf32, #tpu.memory_space<vmem>>, vector<8x1xf32>
    %58 = vector.broadcast %57 : vector<8x1xf32> to vector<8x256xf32>
    %59 = arith.mulf %56, %58 : vector<8x256xf32>
    %60 = arith.addf %54, %59 : vector<8x256xf32>
    %c355_i32 = arith.constant 355 : i32
    %61 = tpu.dynamic_rotate %7 by %c355_i32 dim 1 : vector<8x384xf32>, i32 -> vector<8x384xf32>
    %62 = vector.extract_strided_slice %61 {offsets = [0, 0], sizes = [8, 256], strides = [1, 1]} : vector<8x384xf32> to vector<8x256xf32>
    %c0_14 = arith.constant 0 : index
    %c7 = arith.constant 7 : index
    %63 = vector.load %arg2[%c0_14, %c7] : memref<8x49xf32, #tpu.memory_space<vmem>>, vector<8x1xf32>
    %64 = vector.broadcast %63 : vector<8x1xf32> to vector<8x256xf32>
    %65 = arith.mulf %62, %64 : vector<8x256xf32>
    %66 = arith.addf %60, %65 : vector<8x256xf32>
    %c339_i32 = arith.constant 339 : i32
    %67 = tpu.dynamic_rotate %7 by %c339_i32 dim 1 : vector<8x384xf32>, i32 -> vector<8x384xf32>
    %68 = vector.extract_strided_slice %67 {offsets = [0, 0], sizes = [8, 256], strides = [1, 1]} : vector<8x384xf32> to vector<8x256xf32>
    %c0_15 = arith.constant 0 : index
    %c14 = arith.constant 14 : index
    %69 = vector.load %arg2[%c0_15, %c14] : memref<8x49xf32, #tpu.memory_space<vmem>>, vector<8x1xf32>
    %70 = vector.broadcast %69 : vector<8x1xf32> to vector<8x256xf32>
    %71 = arith.mulf %68, %70 : vector<8x256xf32>
    %72 = arith.addf %66, %71 : vector<8x256xf32>
    %c323_i32 = arith.constant 323 : i32
    %73 = tpu.dynamic_rotate %7 by %c323_i32 dim 1 : vector<8x384xf32>, i32 -> vector<8x384xf32>
    %74 = vector.extract_strided_slice %73 {offsets = [0, 0], sizes = [8, 256], strides = [1, 1]} : vector<8x384xf32> to vector<8x256xf32>
    %c0_16 = arith.constant 0 : index
    %c21 = arith.constant 21 : index
    %75 = vector.load %arg2[%c0_16, %c21] : memref<8x49xf32, #tpu.memory_space<vmem>>, vector<8x1xf32>
    %76 = vector.broadcast %75 : vector<8x1xf32> to vector<8x256xf32>
    %77 = arith.mulf %74, %76 : vector<8x256xf32>
    %78 = arith.addf %72, %77 : vector<8x256xf32>
    %c307_i32 = arith.constant 307 : i32
    %79 = tpu.dynamic_rotate %7 by %c307_i32 dim 1 : vector<8x384xf32>, i32 -> vector<8x384xf32>
    %80 = vector.extract_strided_slice %79 {offsets = [0, 0], sizes = [8, 256], strides = [1, 1]} : vector<8x384xf32> to vector<8x256xf32>
    %c0_17 = arith.constant 0 : index
    %c28 = arith.constant 28 : index
    %81 = vector.load %arg2[%c0_17, %c28] : memref<8x49xf32, #tpu.memory_space<vmem>>, vector<8x1xf32>
    %82 = vector.broadcast %81 : vector<8x1xf32> to vector<8x256xf32>
    %83 = arith.mulf %80, %82 : vector<8x256xf32>
    %84 = arith.addf %78, %83 : vector<8x256xf32>
    %c291_i32 = arith.constant 291 : i32
    %85 = tpu.dynamic_rotate %7 by %c291_i32 dim 1 : vector<8x384xf32>, i32 -> vector<8x384xf32>
    %86 = vector.extract_strided_slice %85 {offsets = [0, 0], sizes = [8, 256], strides = [1, 1]} : vector<8x384xf32> to vector<8x256xf32>
    %c0_18 = arith.constant 0 : index
    %c35 = arith.constant 35 : index
    %87 = vector.load %arg2[%c0_18, %c35] : memref<8x49xf32, #tpu.memory_space<vmem>>, vector<8x1xf32>
    %88 = vector.broadcast %87 : vector<8x1xf32> to vector<8x256xf32>
    %89 = arith.mulf %86, %88 : vector<8x256xf32>
    %90 = arith.addf %84, %89 : vector<8x256xf32>
    %c275_i32 = arith.constant 275 : i32
    %91 = tpu.dynamic_rotate %7 by %c275_i32 dim 1 : vector<8x384xf32>, i32 -> vector<8x384xf32>
    %92 = vector.extract_strided_slice %91 {offsets = [0, 0], sizes = [8, 256], strides = [1, 1]} : vector<8x384xf32> to vector<8x256xf32>
    %c0_19 = arith.constant 0 : index
    %c42 = arith.constant 42 : index
    %93 = vector.load %arg2[%c0_19, %c42] : memref<8x49xf32, #tpu.memory_space<vmem>>, vector<8x1xf32>
    %94 = vector.broadcast %93 : vector<8x1xf32> to vector<8x256xf32>
    %95 = arith.mulf %92, %94 : vector<8x256xf32>
    %96 = arith.addf %90, %95 : vector<8x256xf32>
    %97 = vector.broadcast %17 : vector<1x256xf32> to vector<8x256xf32>
    %98 = arith.mulf %96, %97 : vector<8x256xf32>
    %99 = arith.addf %53, %98 : vector<8x256xf32>
    %cst_20 = arith.constant 0.000000e+00 : f32
    %100 = vector.broadcast %cst_20 : f32 to vector<8x256xf32>
    %c370_i32 = arith.constant 370 : i32
    %101 = tpu.dynamic_rotate %7 by %c370_i32 dim 1 : vector<8x384xf32>, i32 -> vector<8x384xf32>
    %102 = vector.extract_strided_slice %101 {offsets = [0, 0], sizes = [8, 256], strides = [1, 1]} : vector<8x384xf32> to vector<8x256xf32>
    %c0_21 = arith.constant 0 : index
    %c1 = arith.constant 1 : index
    %103 = vector.load %arg2[%c0_21, %c1] : memref<8x49xf32, #tpu.memory_space<vmem>>, vector<8x1xf32>
    %104 = vector.broadcast %103 : vector<8x1xf32> to vector<8x256xf32>
    %105 = arith.mulf %102, %104 : vector<8x256xf32>
    %106 = arith.addf %100, %105 : vector<8x256xf32>
    %c354_i32 = arith.constant 354 : i32
    %107 = tpu.dynamic_rotate %7 by %c354_i32 dim 1 : vector<8x384xf32>, i32 -> vector<8x384xf32>
    %108 = vector.extract_strided_slice %107 {offsets = [0, 0], sizes = [8, 256], strides = [1, 1]} : vector<8x384xf32> to vector<8x256xf32>
    %c0_22 = arith.constant 0 : index
    %c8 = arith.constant 8 : index
    %109 = vector.load %arg2[%c0_22, %c8] : memref<8x49xf32, #tpu.memory_space<vmem>>, vector<8x1xf32>
    %110 = vector.broadcast %109 : vector<8x1xf32> to vector<8x256xf32>
    %111 = arith.mulf %108, %110 : vector<8x256xf32>
    %112 = arith.addf %106, %111 : vector<8x256xf32>
    %c338_i32 = arith.constant 338 : i32
    %113 = tpu.dynamic_rotate %7 by %c338_i32 dim 1 : vector<8x384xf32>, i32 -> vector<8x384xf32>
    %114 = vector.extract_strided_slice %113 {offsets = [0, 0], sizes = [8, 256], strides = [1, 1]} : vector<8x384xf32> to vector<8x256xf32>
    %c0_23 = arith.constant 0 : index
    %c15 = arith.constant 15 : index
    %115 = vector.load %arg2[%c0_23, %c15] : memref<8x49xf32, #tpu.memory_space<vmem>>, vector<8x1xf32>
    %116 = vector.broadcast %115 : vector<8x1xf32> to vector<8x256xf32>
    %117 = arith.mulf %114, %116 : vector<8x256xf32>
    %118 = arith.addf %112, %117 : vector<8x256xf32>
    %c322_i32 = arith.constant 322 : i32
    %119 = tpu.dynamic_rotate %7 by %c322_i32 dim 1 : vector<8x384xf32>, i32 -> vector<8x384xf32>
    %120 = vector.extract_strided_slice %119 {offsets = [0, 0], sizes = [8, 256], strides = [1, 1]} : vector<8x384xf32> to vector<8x256xf32>
    %c0_24 = arith.constant 0 : index
    %c22 = arith.constant 22 : index
    %121 = vector.load %arg2[%c0_24, %c22] : memref<8x49xf32, #tpu.memory_space<vmem>>, vector<8x1xf32>
    %122 = vector.broadcast %121 : vector<8x1xf32> to vector<8x256xf32>
    %123 = arith.mulf %120, %122 : vector<8x256xf32>
    %124 = arith.addf %118, %123 : vector<8x256xf32>
    %c306_i32 = arith.constant 306 : i32
    %125 = tpu.dynamic_rotate %7 by %c306_i32 dim 1 : vector<8x384xf32>, i32 -> vector<8x384xf32>
    %126 = vector.extract_strided_slice %125 {offsets = [0, 0], sizes = [8, 256], strides = [1, 1]} : vector<8x384xf32> to vector<8x256xf32>
    %c0_25 = arith.constant 0 : index
    %c29 = arith.constant 29 : index
    %127 = vector.load %arg2[%c0_25, %c29] : memref<8x49xf32, #tpu.memory_space<vmem>>, vector<8x1xf32>
    %128 = vector.broadcast %127 : vector<8x1xf32> to vector<8x256xf32>
    %129 = arith.mulf %126, %128 : vector<8x256xf32>
    %130 = arith.addf %124, %129 : vector<8x256xf32>
    %c290_i32 = arith.constant 290 : i32
    %131 = tpu.dynamic_rotate %7 by %c290_i32 dim 1 : vector<8x384xf32>, i32 -> vector<8x384xf32>
    %132 = vector.extract_strided_slice %131 {offsets = [0, 0], sizes = [8, 256], strides = [1, 1]} : vector<8x384xf32> to vector<8x256xf32>
    %c0_26 = arith.constant 0 : index
    %c36 = arith.constant 36 : index
    %133 = vector.load %arg2[%c0_26, %c36] : memref<8x49xf32, #tpu.memory_space<vmem>>, vector<8x1xf32>
    %134 = vector.broadcast %133 : vector<8x1xf32> to vector<8x256xf32>
    %135 = arith.mulf %132, %134 : vector<8x256xf32>
    %136 = arith.addf %130, %135 : vector<8x256xf32>
    %c274_i32 = arith.constant 274 : i32
    %137 = tpu.dynamic_rotate %7 by %c274_i32 dim 1 : vector<8x384xf32>, i32 -> vector<8x384xf32>
    %138 = vector.extract_strided_slice %137 {offsets = [0, 0], sizes = [8, 256], strides = [1, 1]} : vector<8x384xf32> to vector<8x256xf32>
    %c0_27 = arith.constant 0 : index
    %c43 = arith.constant 43 : index
    %139 = vector.load %arg2[%c0_27, %c43] : memref<8x49xf32, #tpu.memory_space<vmem>>, vector<8x1xf32>
    %140 = vector.broadcast %139 : vector<8x1xf32> to vector<8x256xf32>
    %141 = arith.mulf %138, %140 : vector<8x256xf32>
    %142 = arith.addf %136, %141 : vector<8x256xf32>
    %143 = vector.broadcast %24 : vector<1x256xf32> to vector<8x256xf32>
    %144 = arith.mulf %142, %143 : vector<8x256xf32>
    %145 = arith.addf %99, %144 : vector<8x256xf32>
    %cst_28 = arith.constant 0.000000e+00 : f32
    %146 = vector.broadcast %cst_28 : f32 to vector<8x256xf32>
    %c369_i32 = arith.constant 369 : i32
    %147 = tpu.dynamic_rotate %7 by %c369_i32 dim 1 : vector<8x384xf32>, i32 -> vector<8x384xf32>
    %148 = vector.extract_strided_slice %147 {offsets = [0, 0], sizes = [8, 256], strides = [1, 1]} : vector<8x384xf32> to vector<8x256xf32>
    %c0_29 = arith.constant 0 : index
    %c2 = arith.constant 2 : index
    %149 = vector.load %arg2[%c0_29, %c2] : memref<8x49xf32, #tpu.memory_space<vmem>>, vector<8x1xf32>
    %150 = vector.broadcast %149 : vector<8x1xf32> to vector<8x256xf32>
    %151 = arith.mulf %148, %150 : vector<8x256xf32>
    %152 = arith.addf %146, %151 : vector<8x256xf32>
    %c353_i32 = arith.constant 353 : i32
    %153 = tpu.dynamic_rotate %7 by %c353_i32 dim 1 : vector<8x384xf32>, i32 -> vector<8x384xf32>
    %154 = vector.extract_strided_slice %153 {offsets = [0, 0], sizes = [8, 256], strides = [1, 1]} : vector<8x384xf32> to vector<8x256xf32>
    %c0_30 = arith.constant 0 : index
    %c9 = arith.constant 9 : index
    %155 = vector.load %arg2[%c0_30, %c9] : memref<8x49xf32, #tpu.memory_space<vmem>>, vector<8x1xf32>
    %156 = vector.broadcast %155 : vector<8x1xf32> to vector<8x256xf32>
    %157 = arith.mulf %154, %156 : vector<8x256xf32>
    %158 = arith.addf %152, %157 : vector<8x256xf32>
    %c337_i32 = arith.constant 337 : i32
    %159 = tpu.dynamic_rotate %7 by %c337_i32 dim 1 : vector<8x384xf32>, i32 -> vector<8x384xf32>
    %160 = vector.extract_strided_slice %159 {offsets = [0, 0], sizes = [8, 256], strides = [1, 1]} : vector<8x384xf32> to vector<8x256xf32>
    %c0_31 = arith.constant 0 : index
    %c16 = arith.constant 16 : index
    %161 = vector.load %arg2[%c0_31, %c16] : memref<8x49xf32, #tpu.memory_space<vmem>>, vector<8x1xf32>
    %162 = vector.broadcast %161 : vector<8x1xf32> to vector<8x256xf32>
    %163 = arith.mulf %160, %162 : vector<8x256xf32>
    %164 = arith.addf %158, %163 : vector<8x256xf32>
    %c321_i32 = arith.constant 321 : i32
    %165 = tpu.dynamic_rotate %7 by %c321_i32 dim 1 : vector<8x384xf32>, i32 -> vector<8x384xf32>
    %166 = vector.extract_strided_slice %165 {offsets = [0, 0], sizes = [8, 256], strides = [1, 1]} : vector<8x384xf32> to vector<8x256xf32>
    %c0_32 = arith.constant 0 : index
    %c23 = arith.constant 23 : index
    %167 = vector.load %arg2[%c0_32, %c23] : memref<8x49xf32, #tpu.memory_space<vmem>>, vector<8x1xf32>
    %168 = vector.broadcast %167 : vector<8x1xf32> to vector<8x256xf32>
    %169 = arith.mulf %166, %168 : vector<8x256xf32>
    %170 = arith.addf %164, %169 : vector<8x256xf32>
    %c305_i32 = arith.constant 305 : i32
    %171 = tpu.dynamic_rotate %7 by %c305_i32 dim 1 : vector<8x384xf32>, i32 -> vector<8x384xf32>
    %172 = vector.extract_strided_slice %171 {offsets = [0, 0], sizes = [8, 256], strides = [1, 1]} : vector<8x384xf32> to vector<8x256xf32>
    %c0_33 = arith.constant 0 : index
    %c30 = arith.constant 30 : index
    %173 = vector.load %arg2[%c0_33, %c30] : memref<8x49xf32, #tpu.memory_space<vmem>>, vector<8x1xf32>
    %174 = vector.broadcast %173 : vector<8x1xf32> to vector<8x256xf32>
    %175 = arith.mulf %172, %174 : vector<8x256xf32>
    %176 = arith.addf %170, %175 : vector<8x256xf32>
    %c289_i32 = arith.constant 289 : i32
    %177 = tpu.dynamic_rotate %7 by %c289_i32 dim 1 : vector<8x384xf32>, i32 -> vector<8x384xf32>
    %178 = vector.extract_strided_slice %177 {offsets = [0, 0], sizes = [8, 256], strides = [1, 1]} : vector<8x384xf32> to vector<8x256xf32>
    %c0_34 = arith.constant 0 : index
    %c37 = arith.constant 37 : index
    %179 = vector.load %arg2[%c0_34, %c37] : memref<8x49xf32, #tpu.memory_space<vmem>>, vector<8x1xf32>
    %180 = vector.broadcast %179 : vector<8x1xf32> to vector<8x256xf32>
    %181 = arith.mulf %178, %180 : vector<8x256xf32>
    %182 = arith.addf %176, %181 : vector<8x256xf32>
    %c273_i32 = arith.constant 273 : i32
    %183 = tpu.dynamic_rotate %7 by %c273_i32 dim 1 : vector<8x384xf32>, i32 -> vector<8x384xf32>
    %184 = vector.extract_strided_slice %183 {offsets = [0, 0], sizes = [8, 256], strides = [1, 1]} : vector<8x384xf32> to vector<8x256xf32>
    %c0_35 = arith.constant 0 : index
    %c44 = arith.constant 44 : index
    %185 = vector.load %arg2[%c0_35, %c44] : memref<8x49xf32, #tpu.memory_space<vmem>>, vector<8x1xf32>
    %186 = vector.broadcast %185 : vector<8x1xf32> to vector<8x256xf32>
    %187 = arith.mulf %184, %186 : vector<8x256xf32>
    %188 = arith.addf %182, %187 : vector<8x256xf32>
    %189 = vector.broadcast %31 : vector<1x256xf32> to vector<8x256xf32>
    %190 = arith.mulf %188, %189 : vector<8x256xf32>
    %191 = arith.addf %145, %190 : vector<8x256xf32>
    %cst_36 = arith.constant 0.000000e+00 : f32
    %192 = vector.broadcast %cst_36 : f32 to vector<8x256xf32>
    %c368_i32 = arith.constant 368 : i32
    %193 = tpu.dynamic_rotate %7 by %c368_i32 dim 1 : vector<8x384xf32>, i32 -> vector<8x384xf32>
    %194 = vector.extract_strided_slice %193 {offsets = [0, 0], sizes = [8, 256], strides = [1, 1]} : vector<8x384xf32> to vector<8x256xf32>
    %c0_37 = arith.constant 0 : index
    %c3 = arith.constant 3 : index
    %195 = vector.load %arg2[%c0_37, %c3] : memref<8x49xf32, #tpu.memory_space<vmem>>, vector<8x1xf32>
    %196 = vector.broadcast %195 : vector<8x1xf32> to vector<8x256xf32>
    %197 = arith.mulf %194, %196 : vector<8x256xf32>
    %198 = arith.addf %192, %197 : vector<8x256xf32>
    %c352_i32 = arith.constant 352 : i32
    %199 = tpu.dynamic_rotate %7 by %c352_i32 dim 1 : vector<8x384xf32>, i32 -> vector<8x384xf32>
    %200 = vector.extract_strided_slice %199 {offsets = [0, 0], sizes = [8, 256], strides = [1, 1]} : vector<8x384xf32> to vector<8x256xf32>
    %c0_38 = arith.constant 0 : index
    %c10 = arith.constant 10 : index
    %201 = vector.load %arg2[%c0_38, %c10] : memref<8x49xf32, #tpu.memory_space<vmem>>, vector<8x1xf32>
    %202 = vector.broadcast %201 : vector<8x1xf32> to vector<8x256xf32>
    %203 = arith.mulf %200, %202 : vector<8x256xf32>
    %204 = arith.addf %198, %203 : vector<8x256xf32>
    %c336_i32 = arith.constant 336 : i32
    %205 = tpu.dynamic_rotate %7 by %c336_i32 dim 1 : vector<8x384xf32>, i32 -> vector<8x384xf32>
    %206 = vector.extract_strided_slice %205 {offsets = [0, 0], sizes = [8, 256], strides = [1, 1]} : vector<8x384xf32> to vector<8x256xf32>
    %c0_39 = arith.constant 0 : index
    %c17 = arith.constant 17 : index
    %207 = vector.load %arg2[%c0_39, %c17] : memref<8x49xf32, #tpu.memory_space<vmem>>, vector<8x1xf32>
    %208 = vector.broadcast %207 : vector<8x1xf32> to vector<8x256xf32>
    %209 = arith.mulf %206, %208 : vector<8x256xf32>
    %210 = arith.addf %204, %209 : vector<8x256xf32>
    %c320_i32 = arith.constant 320 : i32
    %211 = tpu.dynamic_rotate %7 by %c320_i32 dim 1 : vector<8x384xf32>, i32 -> vector<8x384xf32>
    %212 = vector.extract_strided_slice %211 {offsets = [0, 0], sizes = [8, 256], strides = [1, 1]} : vector<8x384xf32> to vector<8x256xf32>
    %c0_40 = arith.constant 0 : index
    %c24 = arith.constant 24 : index
    %213 = vector.load %arg2[%c0_40, %c24] : memref<8x49xf32, #tpu.memory_space<vmem>>, vector<8x1xf32>
    %214 = vector.broadcast %213 : vector<8x1xf32> to vector<8x256xf32>
    %215 = arith.mulf %212, %214 : vector<8x256xf32>
    %216 = arith.addf %210, %215 : vector<8x256xf32>
    %c304_i32 = arith.constant 304 : i32
    %217 = tpu.dynamic_rotate %7 by %c304_i32 dim 1 : vector<8x384xf32>, i32 -> vector<8x384xf32>
    %218 = vector.extract_strided_slice %217 {offsets = [0, 0], sizes = [8, 256], strides = [1, 1]} : vector<8x384xf32> to vector<8x256xf32>
    %c0_41 = arith.constant 0 : index
    %c31 = arith.constant 31 : index
    %219 = vector.load %arg2[%c0_41, %c31] : memref<8x49xf32, #tpu.memory_space<vmem>>, vector<8x1xf32>
    %220 = vector.broadcast %219 : vector<8x1xf32> to vector<8x256xf32>
    %221 = arith.mulf %218, %220 : vector<8x256xf32>
    %222 = arith.addf %216, %221 : vector<8x256xf32>
    %c288_i32 = arith.constant 288 : i32
    %223 = tpu.dynamic_rotate %7 by %c288_i32 dim 1 : vector<8x384xf32>, i32 -> vector<8x384xf32>
    %224 = vector.extract_strided_slice %223 {offsets = [0, 0], sizes = [8, 256], strides = [1, 1]} : vector<8x384xf32> to vector<8x256xf32>
    %c0_42 = arith.constant 0 : index
    %c38 = arith.constant 38 : index
    %225 = vector.load %arg2[%c0_42, %c38] : memref<8x49xf32, #tpu.memory_space<vmem>>, vector<8x1xf32>
    %226 = vector.broadcast %225 : vector<8x1xf32> to vector<8x256xf32>
    %227 = arith.mulf %224, %226 : vector<8x256xf32>
    %228 = arith.addf %222, %227 : vector<8x256xf32>
    %c272_i32 = arith.constant 272 : i32
    %229 = tpu.dynamic_rotate %7 by %c272_i32 dim 1 : vector<8x384xf32>, i32 -> vector<8x384xf32>
    %230 = vector.extract_strided_slice %229 {offsets = [0, 0], sizes = [8, 256], strides = [1, 1]} : vector<8x384xf32> to vector<8x256xf32>
    %c0_43 = arith.constant 0 : index
    %c45 = arith.constant 45 : index
    %231 = vector.load %arg2[%c0_43, %c45] : memref<8x49xf32, #tpu.memory_space<vmem>>, vector<8x1xf32>
    %232 = vector.broadcast %231 : vector<8x1xf32> to vector<8x256xf32>
    %233 = arith.mulf %230, %232 : vector<8x256xf32>
    %234 = arith.addf %228, %233 : vector<8x256xf32>
    %235 = arith.addf %191, %234 : vector<8x256xf32>
    %cst_44 = arith.constant 0.000000e+00 : f32
    %236 = vector.broadcast %cst_44 : f32 to vector<8x256xf32>
    %c367_i32 = arith.constant 367 : i32
    %237 = tpu.dynamic_rotate %7 by %c367_i32 dim 1 : vector<8x384xf32>, i32 -> vector<8x384xf32>
    %238 = vector.extract_strided_slice %237 {offsets = [0, 0], sizes = [8, 256], strides = [1, 1]} : vector<8x384xf32> to vector<8x256xf32>
    %c0_45 = arith.constant 0 : index
    %c4 = arith.constant 4 : index
    %239 = vector.load %arg2[%c0_45, %c4] : memref<8x49xf32, #tpu.memory_space<vmem>>, vector<8x1xf32>
    %240 = vector.broadcast %239 : vector<8x1xf32> to vector<8x256xf32>
    %241 = arith.mulf %238, %240 : vector<8x256xf32>
    %242 = arith.addf %236, %241 : vector<8x256xf32>
    %c351_i32 = arith.constant 351 : i32
    %243 = tpu.dynamic_rotate %7 by %c351_i32 dim 1 : vector<8x384xf32>, i32 -> vector<8x384xf32>
    %244 = vector.extract_strided_slice %243 {offsets = [0, 0], sizes = [8, 256], strides = [1, 1]} : vector<8x384xf32> to vector<8x256xf32>
    %c0_46 = arith.constant 0 : index
    %c11 = arith.constant 11 : index
    %245 = vector.load %arg2[%c0_46, %c11] : memref<8x49xf32, #tpu.memory_space<vmem>>, vector<8x1xf32>
    %246 = vector.broadcast %245 : vector<8x1xf32> to vector<8x256xf32>
    %247 = arith.mulf %244, %246 : vector<8x256xf32>
    %248 = arith.addf %242, %247 : vector<8x256xf32>
    %c335_i32 = arith.constant 335 : i32
    %249 = tpu.dynamic_rotate %7 by %c335_i32 dim 1 : vector<8x384xf32>, i32 -> vector<8x384xf32>
    %250 = vector.extract_strided_slice %249 {offsets = [0, 0], sizes = [8, 256], strides = [1, 1]} : vector<8x384xf32> to vector<8x256xf32>
    %c0_47 = arith.constant 0 : index
    %c18 = arith.constant 18 : index
    %251 = vector.load %arg2[%c0_47, %c18] : memref<8x49xf32, #tpu.memory_space<vmem>>, vector<8x1xf32>
    %252 = vector.broadcast %251 : vector<8x1xf32> to vector<8x256xf32>
    %253 = arith.mulf %250, %252 : vector<8x256xf32>
    %254 = arith.addf %248, %253 : vector<8x256xf32>
    %c319_i32 = arith.constant 319 : i32
    %255 = tpu.dynamic_rotate %7 by %c319_i32 dim 1 : vector<8x384xf32>, i32 -> vector<8x384xf32>
    %256 = vector.extract_strided_slice %255 {offsets = [0, 0], sizes = [8, 256], strides = [1, 1]} : vector<8x384xf32> to vector<8x256xf32>
    %c0_48 = arith.constant 0 : index
    %c25 = arith.constant 25 : index
    %257 = vector.load %arg2[%c0_48, %c25] : memref<8x49xf32, #tpu.memory_space<vmem>>, vector<8x1xf32>
    %258 = vector.broadcast %257 : vector<8x1xf32> to vector<8x256xf32>
    %259 = arith.mulf %256, %258 : vector<8x256xf32>
    %260 = arith.addf %254, %259 : vector<8x256xf32>
    %c303_i32 = arith.constant 303 : i32
    %261 = tpu.dynamic_rotate %7 by %c303_i32 dim 1 : vector<8x384xf32>, i32 -> vector<8x384xf32>
    %262 = vector.extract_strided_slice %261 {offsets = [0, 0], sizes = [8, 256], strides = [1, 1]} : vector<8x384xf32> to vector<8x256xf32>
    %c0_49 = arith.constant 0 : index
    %c32 = arith.constant 32 : index
    %263 = vector.load %arg2[%c0_49, %c32] : memref<8x49xf32, #tpu.memory_space<vmem>>, vector<8x1xf32>
    %264 = vector.broadcast %263 : vector<8x1xf32> to vector<8x256xf32>
    %265 = arith.mulf %262, %264 : vector<8x256xf32>
    %266 = arith.addf %260, %265 : vector<8x256xf32>
    %c287_i32 = arith.constant 287 : i32
    %267 = tpu.dynamic_rotate %7 by %c287_i32 dim 1 : vector<8x384xf32>, i32 -> vector<8x384xf32>
    %268 = vector.extract_strided_slice %267 {offsets = [0, 0], sizes = [8, 256], strides = [1, 1]} : vector<8x384xf32> to vector<8x256xf32>
    %c0_50 = arith.constant 0 : index
    %c39 = arith.constant 39 : index
    %269 = vector.load %arg2[%c0_50, %c39] : memref<8x49xf32, #tpu.memory_space<vmem>>, vector<8x1xf32>
    %270 = vector.broadcast %269 : vector<8x1xf32> to vector<8x256xf32>
    %271 = arith.mulf %268, %270 : vector<8x256xf32>
    %272 = arith.addf %266, %271 : vector<8x256xf32>
    %c271_i32 = arith.constant 271 : i32
    %273 = tpu.dynamic_rotate %7 by %c271_i32 dim 1 : vector<8x384xf32>, i32 -> vector<8x384xf32>
    %274 = vector.extract_strided_slice %273 {offsets = [0, 0], sizes = [8, 256], strides = [1, 1]} : vector<8x384xf32> to vector<8x256xf32>
    %c0_51 = arith.constant 0 : index
    %c46 = arith.constant 46 : index
    %275 = vector.load %arg2[%c0_51, %c46] : memref<8x49xf32, #tpu.memory_space<vmem>>, vector<8x1xf32>
    %276 = vector.broadcast %275 : vector<8x1xf32> to vector<8x256xf32>
    %277 = arith.mulf %274, %276 : vector<8x256xf32>
    %278 = arith.addf %272, %277 : vector<8x256xf32>
    %279 = vector.broadcast %38 : vector<1x256xf32> to vector<8x256xf32>
    %280 = arith.mulf %278, %279 : vector<8x256xf32>
    %281 = arith.addf %235, %280 : vector<8x256xf32>
    %cst_52 = arith.constant 0.000000e+00 : f32
    %282 = vector.broadcast %cst_52 : f32 to vector<8x256xf32>
    %c366_i32 = arith.constant 366 : i32
    %283 = tpu.dynamic_rotate %7 by %c366_i32 dim 1 : vector<8x384xf32>, i32 -> vector<8x384xf32>
    %284 = vector.extract_strided_slice %283 {offsets = [0, 0], sizes = [8, 256], strides = [1, 1]} : vector<8x384xf32> to vector<8x256xf32>
    %c0_53 = arith.constant 0 : index
    %c5 = arith.constant 5 : index
    %285 = vector.load %arg2[%c0_53, %c5] : memref<8x49xf32, #tpu.memory_space<vmem>>, vector<8x1xf32>
    %286 = vector.broadcast %285 : vector<8x1xf32> to vector<8x256xf32>
    %287 = arith.mulf %284, %286 : vector<8x256xf32>
    %288 = arith.addf %282, %287 : vector<8x256xf32>
    %c350_i32 = arith.constant 350 : i32
    %289 = tpu.dynamic_rotate %7 by %c350_i32 dim 1 : vector<8x384xf32>, i32 -> vector<8x384xf32>
    %290 = vector.extract_strided_slice %289 {offsets = [0, 0], sizes = [8, 256], strides = [1, 1]} : vector<8x384xf32> to vector<8x256xf32>
    %c0_54 = arith.constant 0 : index
    %c12 = arith.constant 12 : index
    %291 = vector.load %arg2[%c0_54, %c12] : memref<8x49xf32, #tpu.memory_space<vmem>>, vector<8x1xf32>
    %292 = vector.broadcast %291 : vector<8x1xf32> to vector<8x256xf32>
    %293 = arith.mulf %290, %292 : vector<8x256xf32>
    %294 = arith.addf %288, %293 : vector<8x256xf32>
    %c334_i32 = arith.constant 334 : i32
    %295 = tpu.dynamic_rotate %7 by %c334_i32 dim 1 : vector<8x384xf32>, i32 -> vector<8x384xf32>
    %296 = vector.extract_strided_slice %295 {offsets = [0, 0], sizes = [8, 256], strides = [1, 1]} : vector<8x384xf32> to vector<8x256xf32>
    %c0_55 = arith.constant 0 : index
    %c19 = arith.constant 19 : index
    %297 = vector.load %arg2[%c0_55, %c19] : memref<8x49xf32, #tpu.memory_space<vmem>>, vector<8x1xf32>
    %298 = vector.broadcast %297 : vector<8x1xf32> to vector<8x256xf32>
    %299 = arith.mulf %296, %298 : vector<8x256xf32>
    %300 = arith.addf %294, %299 : vector<8x256xf32>
    %c318_i32 = arith.constant 318 : i32
    %301 = tpu.dynamic_rotate %7 by %c318_i32 dim 1 : vector<8x384xf32>, i32 -> vector<8x384xf32>
    %302 = vector.extract_strided_slice %301 {offsets = [0, 0], sizes = [8, 256], strides = [1, 1]} : vector<8x384xf32> to vector<8x256xf32>
    %c0_56 = arith.constant 0 : index
    %c26 = arith.constant 26 : index
    %303 = vector.load %arg2[%c0_56, %c26] : memref<8x49xf32, #tpu.memory_space<vmem>>, vector<8x1xf32>
    %304 = vector.broadcast %303 : vector<8x1xf32> to vector<8x256xf32>
    %305 = arith.mulf %302, %304 : vector<8x256xf32>
    %306 = arith.addf %300, %305 : vector<8x256xf32>
    %c302_i32 = arith.constant 302 : i32
    %307 = tpu.dynamic_rotate %7 by %c302_i32 dim 1 : vector<8x384xf32>, i32 -> vector<8x384xf32>
    %308 = vector.extract_strided_slice %307 {offsets = [0, 0], sizes = [8, 256], strides = [1, 1]} : vector<8x384xf32> to vector<8x256xf32>
    %c0_57 = arith.constant 0 : index
    %c33 = arith.constant 33 : index
    %309 = vector.load %arg2[%c0_57, %c33] : memref<8x49xf32, #tpu.memory_space<vmem>>, vector<8x1xf32>
    %310 = vector.broadcast %309 : vector<8x1xf32> to vector<8x256xf32>
    %311 = arith.mulf %308, %310 : vector<8x256xf32>
    %312 = arith.addf %306, %311 : vector<8x256xf32>
    %c286_i32 = arith.constant 286 : i32
    %313 = tpu.dynamic_rotate %7 by %c286_i32 dim 1 : vector<8x384xf32>, i32 -> vector<8x384xf32>
    %314 = vector.extract_strided_slice %313 {offsets = [0, 0], sizes = [8, 256], strides = [1, 1]} : vector<8x384xf32> to vector<8x256xf32>
    %c0_58 = arith.constant 0 : index
    %c40 = arith.constant 40 : index
    %315 = vector.load %arg2[%c0_58, %c40] : memref<8x49xf32, #tpu.memory_space<vmem>>, vector<8x1xf32>
    %316 = vector.broadcast %315 : vector<8x1xf32> to vector<8x256xf32>
    %317 = arith.mulf %314, %316 : vector<8x256xf32>
    %318 = arith.addf %312, %317 : vector<8x256xf32>
    %c270_i32 = arith.constant 270 : i32
    %319 = tpu.dynamic_rotate %7 by %c270_i32 dim 1 : vector<8x384xf32>, i32 -> vector<8x384xf32>
    %320 = vector.extract_strided_slice %319 {offsets = [0, 0], sizes = [8, 256], strides = [1, 1]} : vector<8x384xf32> to vector<8x256xf32>
    %c0_59 = arith.constant 0 : index
    %c47 = arith.constant 47 : index
    %321 = vector.load %arg2[%c0_59, %c47] : memref<8x49xf32, #tpu.memory_space<vmem>>, vector<8x1xf32>
    %322 = vector.broadcast %321 : vector<8x1xf32> to vector<8x256xf32>
    %323 = arith.mulf %320, %322 : vector<8x256xf32>
    %324 = arith.addf %318, %323 : vector<8x256xf32>
    %325 = vector.broadcast %45 : vector<1x256xf32> to vector<8x256xf32>
    %326 = arith.mulf %324, %325 : vector<8x256xf32>
    %327 = arith.addf %281, %326 : vector<8x256xf32>
    %cst_60 = arith.constant 0.000000e+00 : f32
    %328 = vector.broadcast %cst_60 : f32 to vector<8x256xf32>
    %c365_i32 = arith.constant 365 : i32
    %329 = tpu.dynamic_rotate %7 by %c365_i32 dim 1 : vector<8x384xf32>, i32 -> vector<8x384xf32>
    %330 = vector.extract_strided_slice %329 {offsets = [0, 0], sizes = [8, 256], strides = [1, 1]} : vector<8x384xf32> to vector<8x256xf32>
    %c0_61 = arith.constant 0 : index
    %c6 = arith.constant 6 : index
    %331 = vector.load %arg2[%c0_61, %c6] : memref<8x49xf32, #tpu.memory_space<vmem>>, vector<8x1xf32>
    %332 = vector.broadcast %331 : vector<8x1xf32> to vector<8x256xf32>
    %333 = arith.mulf %330, %332 : vector<8x256xf32>
    %334 = arith.addf %328, %333 : vector<8x256xf32>
    %c349_i32 = arith.constant 349 : i32
    %335 = tpu.dynamic_rotate %7 by %c349_i32 dim 1 : vector<8x384xf32>, i32 -> vector<8x384xf32>
    %336 = vector.extract_strided_slice %335 {offsets = [0, 0], sizes = [8, 256], strides = [1, 1]} : vector<8x384xf32> to vector<8x256xf32>
    %c0_62 = arith.constant 0 : index
    %c13 = arith.constant 13 : index
    %337 = vector.load %arg2[%c0_62, %c13] : memref<8x49xf32, #tpu.memory_space<vmem>>, vector<8x1xf32>
    %338 = vector.broadcast %337 : vector<8x1xf32> to vector<8x256xf32>
    %339 = arith.mulf %336, %338 : vector<8x256xf32>
    %340 = arith.addf %334, %339 : vector<8x256xf32>
    %c333_i32 = arith.constant 333 : i32
    %341 = tpu.dynamic_rotate %7 by %c333_i32 dim 1 : vector<8x384xf32>, i32 -> vector<8x384xf32>
    %342 = vector.extract_strided_slice %341 {offsets = [0, 0], sizes = [8, 256], strides = [1, 1]} : vector<8x384xf32> to vector<8x256xf32>
    %c0_63 = arith.constant 0 : index
    %c20 = arith.constant 20 : index
    %343 = vector.load %arg2[%c0_63, %c20] : memref<8x49xf32, #tpu.memory_space<vmem>>, vector<8x1xf32>
    %344 = vector.broadcast %343 : vector<8x1xf32> to vector<8x256xf32>
    %345 = arith.mulf %342, %344 : vector<8x256xf32>
    %346 = arith.addf %340, %345 : vector<8x256xf32>
    %c317_i32 = arith.constant 317 : i32
    %347 = tpu.dynamic_rotate %7 by %c317_i32 dim 1 : vector<8x384xf32>, i32 -> vector<8x384xf32>
    %348 = vector.extract_strided_slice %347 {offsets = [0, 0], sizes = [8, 256], strides = [1, 1]} : vector<8x384xf32> to vector<8x256xf32>
    %c0_64 = arith.constant 0 : index
    %c27 = arith.constant 27 : index
    %349 = vector.load %arg2[%c0_64, %c27] : memref<8x49xf32, #tpu.memory_space<vmem>>, vector<8x1xf32>
    %350 = vector.broadcast %349 : vector<8x1xf32> to vector<8x256xf32>
    %351 = arith.mulf %348, %350 : vector<8x256xf32>
    %352 = arith.addf %346, %351 : vector<8x256xf32>
    %c301_i32 = arith.constant 301 : i32
    %353 = tpu.dynamic_rotate %7 by %c301_i32 dim 1 : vector<8x384xf32>, i32 -> vector<8x384xf32>
    %354 = vector.extract_strided_slice %353 {offsets = [0, 0], sizes = [8, 256], strides = [1, 1]} : vector<8x384xf32> to vector<8x256xf32>
    %c0_65 = arith.constant 0 : index
    %c34 = arith.constant 34 : index
    %355 = vector.load %arg2[%c0_65, %c34] : memref<8x49xf32, #tpu.memory_space<vmem>>, vector<8x1xf32>
    %356 = vector.broadcast %355 : vector<8x1xf32> to vector<8x256xf32>
    %357 = arith.mulf %354, %356 : vector<8x256xf32>
    %358 = arith.addf %352, %357 : vector<8x256xf32>
    %c285_i32 = arith.constant 285 : i32
    %359 = tpu.dynamic_rotate %7 by %c285_i32 dim 1 : vector<8x384xf32>, i32 -> vector<8x384xf32>
    %360 = vector.extract_strided_slice %359 {offsets = [0, 0], sizes = [8, 256], strides = [1, 1]} : vector<8x384xf32> to vector<8x256xf32>
    %c0_66 = arith.constant 0 : index
    %c41 = arith.constant 41 : index
    %361 = vector.load %arg2[%c0_66, %c41] : memref<8x49xf32, #tpu.memory_space<vmem>>, vector<8x1xf32>
    %362 = vector.broadcast %361 : vector<8x1xf32> to vector<8x256xf32>
    %363 = arith.mulf %360, %362 : vector<8x256xf32>
    %364 = arith.addf %358, %363 : vector<8x256xf32>
    %c269_i32 = arith.constant 269 : i32
    %365 = tpu.dynamic_rotate %7 by %c269_i32 dim 1 : vector<8x384xf32>, i32 -> vector<8x384xf32>
    %366 = vector.extract_strided_slice %365 {offsets = [0, 0], sizes = [8, 256], strides = [1, 1]} : vector<8x384xf32> to vector<8x256xf32>
    %c0_67 = arith.constant 0 : index
    %c48 = arith.constant 48 : index
    %367 = vector.load %arg2[%c0_67, %c48] : memref<8x49xf32, #tpu.memory_space<vmem>>, vector<8x1xf32>
    %368 = vector.broadcast %367 : vector<8x1xf32> to vector<8x256xf32>
    %369 = arith.mulf %366, %368 : vector<8x256xf32>
    %370 = arith.addf %364, %369 : vector<8x256xf32>
    %371 = vector.broadcast %52 : vector<1x256xf32> to vector<8x256xf32>
    %372 = arith.mulf %370, %371 : vector<8x256xf32>
    %373 = arith.addf %327, %372 : vector<8x256xf32>
    %c0_68 = arith.constant 0 : index
    %c0_69 = arith.constant 0 : index
    %374 = vector.load %arg3[%c0_68, %c0_69] : memref<8x1xf32, #tpu.memory_space<vmem>>, vector<8x1xf32>
    %375 = vector.broadcast %374 : vector<8x1xf32> to vector<8x256xf32>
    %376 = arith.addf %373, %375 : vector<8x256xf32>
    %377 = vector.shape_cast %376 : vector<8x256xf32> to vector<1x8x256xf32>
    %cst_70 = arith.constant dense<0.000000e+00> : vector<1xf32>
    %378 = vector.multi_reduction <add>, %377, %cst_70 [1, 2] : vector<1x8x256xf32> to vector<1xf32>
    %379 = vector.shape_cast %378 : vector<1xf32> to vector<1x1x1xf32>
    %380 = vector.extract %379[0, 0, 0] : f32 from vector<1x1x1xf32>
    %381 = vector.broadcast %380 : f32 to vector<1x1xf32>
    %382 = arith.mulf %376, %376 : vector<8x256xf32>
    %383 = vector.shape_cast %382 : vector<8x256xf32> to vector<1x8x256xf32>
    %cst_71 = arith.constant dense<0.000000e+00> : vector<1xf32>
    %384 = vector.multi_reduction <add>, %383, %cst_71 [1, 2] : vector<1x8x256xf32> to vector<1xf32>
    %385 = vector.shape_cast %384 : vector<1xf32> to vector<1x1x1xf32>
    %386 = vector.extract %385[0, 0, 0] : f32 from vector<1x1x1xf32>
    %387 = vector.broadcast %386 : f32 to vector<1x1xf32>
    %cst_72 = arith.constant 2.048000e+03 : f32
    %388 = vector.broadcast %cst_72 : f32 to vector<1x1xf32>
    %389 = arith.divf %381, %388 : vector<1x1xf32>
    %cst_73 = arith.constant 2.048000e+03 : f32
    %390 = vector.broadcast %cst_73 : f32 to vector<1x1xf32>
    %391 = arith.divf %387, %390 : vector<1x1xf32>
    %392 = arith.mulf %389, %389 : vector<1x1xf32>
    %393 = arith.subf %391, %392 : vector<1x1xf32>
    %cst_74 = arith.constant 9.99999974E-6 : f32
    %394 = vector.broadcast %cst_74 : f32 to vector<1x1xf32>
    %395 = arith.addf %393, %394 : vector<1x1xf32>
    %396 = math.rsqrt %395 : vector<1x1xf32>
    %c0_75 = arith.constant 0 : index
    %c0_76 = arith.constant 0 : index
    %397 = vector.load %arg4[%c0_75, %c0_76] : memref<8x1xf32, #tpu.memory_space<vmem>>, vector<8x1xf32>
    %398 = vector.broadcast %396 : vector<1x1xf32> to vector<8x1xf32>
    %399 = arith.mulf %398, %397 : vector<8x1xf32>
    %c0_77 = arith.constant 0 : index
    %c0_78 = arith.constant 0 : index
    %400 = vector.load %arg5[%c0_77, %c0_78] : memref<8x1xf32, #tpu.memory_space<vmem>>, vector<8x1xf32>
    %401 = vector.broadcast %389 : vector<1x1xf32> to vector<8x1xf32>
    %402 = arith.mulf %401, %399 : vector<8x1xf32>
    %403 = arith.subf %400, %402 : vector<8x1xf32>
    %404 = vector.broadcast %399 : vector<8x1xf32> to vector<8x256xf32>
    %405 = arith.mulf %376, %404 : vector<8x256xf32>
    %406 = vector.broadcast %403 : vector<8x1xf32> to vector<8x256xf32>
    %407 = arith.addf %405, %406 : vector<8x256xf32>
    %c0_79 = arith.constant 0 : index
    %c0_80 = arith.constant 0 : index
    %408 = vector.load %arg6[%c0_79, %c0_80] : memref<32x8xf32, #tpu.memory_space<vmem>>, vector<32x8xf32>
    %cst_81 = arith.constant dense<0.000000e+00> : vector<32x256xf32>
    %409 = tpu.matmul %408, %407, %cst_81 {dimension_numbers = #tpu.dot_dimension_numbers<[1], [0], [0], [1], [0, 0, 1, 1], [], []>} : vector<32x8xf32>, vector<8x256xf32>, vector<32x256xf32> -> vector<32x256xf32>
    %c0_82 = arith.constant 0 : index
    %c0_83 = arith.constant 0 : index
    %410 = vector.load %arg7[%c0_82, %c0_83] : memref<32x1xf32, #tpu.memory_space<vmem>>, vector<32x1xf32>
    %411 = vector.broadcast %410 : vector<32x1xf32> to vector<32x256xf32>
    %412 = arith.addf %409, %411 : vector<32x256xf32>
    %cst_84 = arith.constant 0.707106769 : f32
    %413 = vector.broadcast %cst_84 : f32 to vector<32x256xf32>
    %414 = arith.mulf %412, %413 : vector<32x256xf32>
    %cst_85 = arith.constant 0.000000e+00 : f32
    %415 = vector.broadcast %cst_85 : f32 to vector<32x256xf32>
    %416 = arith.cmpf oge, %414, %415 : vector<32x256xf32>
    %cst_86 = arith.constant 1.000000e+00 : f32
    %cst_87 = arith.constant -1.000000e+00 : f32
    %417 = vector.broadcast %cst_86 : f32 to vector<32x256xf32>
    %418 = vector.broadcast %cst_87 : f32 to vector<32x256xf32>
    %419 = arith.select %416, %417, %418 : vector<32x256xi1>, vector<32x256xf32>
    %420 = math.absf %414 : vector<32x256xf32>
    %cst_88 = arith.constant 0.327591091 : f32
    %421 = vector.broadcast %cst_88 : f32 to vector<32x256xf32>
    %422 = arith.mulf %421, %420 : vector<32x256xf32>
    %cst_89 = arith.constant 1.000000e+00 : f32
    %423 = vector.broadcast %cst_89 : f32 to vector<32x256xf32>
    %424 = arith.addf %423, %422 : vector<32x256xf32>
    %425 = tpu.reciprocal %424 {approx = true} : vector<32x256xf32> -> vector<32x256xf32>
    %426 = arith.mulf %424, %425 : vector<32x256xf32>
    %cst_90 = arith.constant 2.000000e+00 : f32
    %427 = vector.broadcast %cst_90 : f32 to vector<32x256xf32>
    %428 = arith.subf %427, %426 : vector<32x256xf32>
    %429 = arith.mulf %425, %428 : vector<32x256xf32>
    %cst_91 = arith.constant 1.06140542 : f32
    %430 = vector.broadcast %cst_91 : f32 to vector<32x256xf32>
    %431 = arith.mulf %430, %429 : vector<32x256xf32>
    %cst_92 = arith.constant -1.45315206 : f32
    %432 = vector.broadcast %cst_92 : f32 to vector<32x256xf32>
    %433 = arith.addf %431, %432 : vector<32x256xf32>
    %434 = arith.mulf %433, %429 : vector<32x256xf32>
    %cst_93 = arith.constant 1.42141378 : f32
    %435 = vector.broadcast %cst_93 : f32 to vector<32x256xf32>
    %436 = arith.addf %434, %435 : vector<32x256xf32>
    %437 = arith.mulf %436, %429 : vector<32x256xf32>
    %cst_94 = arith.constant -0.284496725 : f32
    %438 = vector.broadcast %cst_94 : f32 to vector<32x256xf32>
    %439 = arith.addf %437, %438 : vector<32x256xf32>
    %440 = arith.mulf %439, %429 : vector<32x256xf32>
    %cst_95 = arith.constant 0.254829586 : f32
    %441 = vector.broadcast %cst_95 : f32 to vector<32x256xf32>
    %442 = arith.addf %440, %441 : vector<32x256xf32>
    %443 = arith.mulf %442, %429 : vector<32x256xf32>
    %cst_96 = arith.constant 0.000000e+00 : f32
    %444 = vector.broadcast %cst_96 : f32 to vector<32x256xf32>
    %445 = arith.subf %444, %420 : vector<32x256xf32>
    %446 = arith.mulf %445, %420 : vector<32x256xf32>
    %447 = math.exp %446 : vector<32x256xf32>
    %448 = arith.mulf %443, %447 : vector<32x256xf32>
    %cst_97 = arith.constant 1.000000e+00 : f32
    %449 = vector.broadcast %cst_97 : f32 to vector<32x256xf32>
    %450 = arith.subf %449, %448 : vector<32x256xf32>
    %451 = arith.mulf %419, %450 : vector<32x256xf32>
    %cst_98 = arith.constant 5.000000e-01 : f32
    %452 = vector.broadcast %cst_98 : f32 to vector<32x256xf32>
    %453 = arith.mulf %452, %412 : vector<32x256xf32>
    %cst_99 = arith.constant 1.000000e+00 : f32
    %454 = vector.broadcast %cst_99 : f32 to vector<32x256xf32>
    %455 = arith.addf %454, %451 : vector<32x256xf32>
    %456 = arith.mulf %453, %455 : vector<32x256xf32>
    %c0_100 = arith.constant 0 : index
    %c0_101 = arith.constant 0 : index
    %457 = vector.load %arg8[%c0_100, %c0_101] : memref<8x32xf32, #tpu.memory_space<vmem>>, vector<8x32xf32>
    %cst_102 = arith.constant dense<0.000000e+00> : vector<8x256xf32>
    %458 = tpu.matmul %457, %456, %cst_102 {dimension_numbers = #tpu.dot_dimension_numbers<[1], [0], [0], [1], [0, 0, 1, 1], [], []>} : vector<8x32xf32>, vector<32x256xf32>, vector<8x256xf32> -> vector<8x256xf32>
    %c0_103 = arith.constant 0 : index
    %c0_104 = arith.constant 0 : index
    %459 = vector.load %arg9[%c0_103, %c0_104] : memref<8x1xf32, #tpu.memory_space<vmem>>, vector<8x1xf32>
    %460 = vector.broadcast %459 : vector<8x1xf32> to vector<8x256xf32>
    %461 = arith.addf %458, %460 : vector<8x256xf32>
    %c0_105 = arith.constant 0 : index
    %c0_106 = arith.constant 0 : index
    %462 = vector.load %arg10[%c0_105, %c0_106] : memref<8x1xf32, #tpu.memory_space<vmem>>, vector<8x1xf32>
    %463 = vector.broadcast %462 : vector<8x1xf32> to vector<8x256xf32>
    %464 = arith.mulf %461, %463 : vector<8x256xf32>
    %465 = arith.addf %1, %464 : vector<8x256xf32>
    %c0_107 = arith.constant 0 : index
    %c0_108 = arith.constant 0 : index
    %c0_109 = arith.constant 0 : index
    %466 = vector.load %arg11[%c0_107, %c0_108, %c0_109] : memref<1x8x256xf32, #tpu.memory_space<vmem>>, vector<1x8x256xf32>
    %467 = vector.shape_cast %466 : vector<1x8x256xf32> to vector<8x256xf32>
    %468 = vector.shape_cast %465 : vector<8x256xf32> to vector<1x8x256xf32>
    tpu.vector_store %arg11[%c0_107, %c0_108, %c0_109], %468 {strides = array<i32>} : memref<1x8x256xf32, #tpu.memory_space<vmem>>, vector<1x8x256xf32>,
    return
  }
  func.func @transform_0(%arg0: i32) -> (i32, i32, i32) {
    %c0_i32 = arith.constant 0 : i32
    %c0_i32_0 = arith.constant 0 : i32
    %c0_i32_1 = arith.constant 0 : i32
    return %arg0, %c0_i32, %c0_i32_0 : i32, i32, i32
  }
  func.func @transform_1(%arg0: i32) -> (i32, i32) {
    %c0_i32 = arith.constant 0 : i32
    %c0_i32_0 = arith.constant 0 : i32
    %c0_i32_1 = arith.constant 0 : i32
    return %c0_i32, %c0_i32_0 : i32, i32
  }
  func.func @transform_2(%arg0: i32) -> (i32, i32) {
    %c0_i32 = arith.constant 0 : i32
    %c0_i32_0 = arith.constant 0 : i32
    %c0_i32_1 = arith.constant 0 : i32
    return %c0_i32, %c0_i32_0 : i32, i32
  }
  func.func @transform_3(%arg0: i32) -> (i32, i32) {
    %c0_i32 = arith.constant 0 : i32
    %c0_i32_0 = arith.constant 0 : i32
    %c0_i32_1 = arith.constant 0 : i32
    return %c0_i32, %c0_i32_0 : i32, i32
  }
  func.func @transform_4(%arg0: i32) -> (i32, i32) {
    %c0_i32 = arith.constant 0 : i32
    %c0_i32_0 = arith.constant 0 : i32
    %c0_i32_1 = arith.constant 0 : i32
    return %c0_i32, %c0_i32_0 : i32, i32
  }
  func.func @transform_5(%arg0: i32) -> (i32, i32) {
    %c0_i32 = arith.constant 0 : i32
    %c0_i32_0 = arith.constant 0 : i32
    %c0_i32_1 = arith.constant 0 : i32
    return %c0_i32, %c0_i32_0 : i32, i32
  }
  func.func @transform_6(%arg0: i32) -> (i32, i32) {
    %c0_i32 = arith.constant 0 : i32
    %c0_i32_0 = arith.constant 0 : i32
    %c0_i32_1 = arith.constant 0 : i32
    return %c0_i32, %c0_i32_0 : i32, i32
  }
  func.func @transform_7(%arg0: i32) -> (i32, i32) {
    %c0_i32 = arith.constant 0 : i32
    %c0_i32_0 = arith.constant 0 : i32
    %c0_i32_1 = arith.constant 0 : i32
    return %c0_i32, %c0_i32_0 : i32, i32
  }
  func.func @transform_8(%arg0: i32) -> (i32, i32) {
    %c0_i32 = arith.constant 0 : i32
    %c0_i32_0 = arith.constant 0 : i32
    %c0_i32_1 = arith.constant 0 : i32
    return %c0_i32, %c0_i32_0 : i32, i32
  }
  func.func @transform_9(%arg0: i32) -> (i32, i32) {
    %c0_i32 = arith.constant 0 : i32
    %c0_i32_0 = arith.constant 0 : i32
    %c0_i32_1 = arith.constant 0 : i32
    return %c0_i32, %c0_i32_0 : i32, i32
  }
  func.func @transform_10(%arg0: i32) -> (i32, i32, i32) {
    %c0_i32 = arith.constant 0 : i32
    %c0_i32_0 = arith.constant 0 : i32
    %c0_i32_1 = arith.constant 0 : i32
    return %arg0, %c0_i32, %c0_i32_0 : i32, i32, i32
  }
}

</mosaic_0001>

<llo_original>
// kernel: tpu_custom_call.1
$region0: #{tpu_custom_call.1}
  #allocation0 [shape = 'u32[]', space=smem, size = 0x4, offset = 0x4, fixed_abs, tag = 'smem constant byte address 0x4 - core index']
  #allocation1 [shape = 'u32[144,128]{1,0:T(1,128)}', space=vmem, size = 0x12000, scoped, tag = 'internal scratch']
  #allocation2 [shape = 'f32[8,384]{1,0:T(8,128)}', space=vmem, size = 0x3000, scoped, tag = 'scratch operand']
  %s0 = inlined_call_operand.vmem [shape: f32[2,8,256], index: 0, kind: input, shape index: {}]
  %s1 = inlined_call_operand.vmem [shape: f32[8,49], index: 1, kind: input, shape index: {}]
  %s2 = inlined_call_operand.vmem [shape: f32[8,1], index: 2, kind: input, shape index: {}]
  %s3 = inlined_call_operand.vmem [shape: f32[8,1], index: 3, kind: input, shape index: {}]
  %s4 = inlined_call_operand.vmem [shape: f32[8,1], index: 4, kind: input, shape index: {}]
  %s5 = inlined_call_operand.vmem [shape: f32[32,8], index: 5, kind: input, shape index: {}]
  %s6 = inlined_call_operand.vmem [shape: f32[32,1], index: 6, kind: input, shape index: {}]
  %s7 = inlined_call_operand.vmem [shape: f32[8,32], index: 7, kind: input, shape index: {}]
  %s8 = inlined_call_operand.vmem [shape: f32[8,1], index: 8, kind: input, shape index: {}]
  %s9 = inlined_call_operand.vmem [shape: f32[8,1], index: 9, kind: input, shape index: {}]
  %s10 = inlined_call_operand.hbm [shape: f32[2,8,256], index: 10, kind: output, shape index: {}]
  %s11 = sld [smem:[#allocation0]]
  $region73: #{tpu_custom_call.1} parent=0
    _
  %s13 = ssub.s32 1, %s11
  %s14 = scalar_select 0, %s13, %s11
  $region1: #{tpu_custom_call.1} parent=0
    #allocation3 [shape = 'u8[16384]{0}', space=vmem, size = 0x4000, scoped, tag = 'output window, operand 0']
    #allocation4 [shape = 's32[2]{0}', space=sflag, size = 0x8, scoped, tag = 'scoped memory for tpu_custom_call.1']
    %15 = vsyncpa [#allocation4], 0
    %s16 = scalar_lea.sflag [#allocation4], 1
    %17 = vsyncpa %s16, 0
    loop: start=0, step=1, limit=4
    $region2: #{tpu_custom_call.1} parent=1 // loop_pre_header
      _
    $region3: #{tpu_custom_call.1} parent=1 // loop_header
      %s19 = sphi 0, %s23
      %p20 = scmp.ge.s32.totalorder %s19, 4
      %s29 = sphi 0, %s31
      %s32 = sphi 0, %s29
      %s33 = sphi 0, %s32
      %s49 = sphi 0, %s33
      %s53 = sphi 0, %s53
      %s55 = sphi 0, %s53
      %s56 = sphi 0, %s55
      %s70 = sphi 0, %s56
      %s74 = sphi 0, %s74
      %s76 = sphi 0, %s74
      %s77 = sphi 0, %s76
      %s91 = sphi 0, %s77
      %s95 = sphi 0, %s95
      %s97 = sphi 0, %s95
      %s98 = sphi 0, %s97
      %s112 = sphi 0, %s98
      %s116 = sphi 0, %s116
      %s118 = sphi 0, %s116
      %s119 = sphi 0, %s118
      %s133 = sphi 0, %s119
      %s137 = sphi 0, %s137
      %s139 = sphi 0, %s137
      %s140 = sphi 0, %s139
      %s154 = sphi 0, %s140
      %s158 = sphi 0, %s158
      %s160 = sphi 0, %s158
      %s161 = sphi 0, %s160
      %s175 = sphi 0, %s161
      %s179 = sphi 0, %s179
      %s181 = sphi 0, %s179
      %s182 = sphi 0, %s181
      %s196 = sphi 0, %s182
      %s200 = sphi 0, %s200
      %s202 = sphi 0, %s200
      %s203 = sphi 0, %s202
      %s217 = sphi 0, %s203
      %s221 = sphi 0, %s221
      %s223 = sphi 0, %s221
      %s224 = sphi 0, %s223
      %s238 = sphi 0, %s224
      %s244 = sphi 0, %s246
      %s247 = sphi 0, %s244
      %s248 = sphi 0, %s247
      %s264 = sphi 0, %s248
    $region4: #{tpu_custom_call.1} parent=1 // loop_header_branch
      %22 = sbr.rel (%p20) target = $region8
    $region5: #{tpu_custom_call.1} parent=1 // loop_body
      %s24 = ssub.s32 %s19, 1
      %s25 = ssub.s32 %s19, 2
      %s26 = sadd.s32 %s19, 1
      %s27 = ssub.s32 %s19, %s26
      %p28 = scmp.eq.s32.totalorder %s27, 0
      %s30 = sadd.s32 %s29, 1
      %s31 = scalar_select %p28, %s29, %s30
      %p34 = pneg %p28
      %p35 = scmp.eq.s32.totalorder %s19, 1
      %p36 = por %p34, %p35
      %p37 = scmp.ne.s32.totalorder %s29, %s32
      %p38 = scmp.eq.s32.totalorder %s19, 0
      %p39 = por %p37, %p38
      %p40 = scmp.ne.s32.totalorder %s29, %s32
      %p41 = scmp.eq.s32.totalorder %s24, 1
      %p42 = por %p40, %p41
      %p43 = scmp.ne.s32.totalorder %s32, %s33
      %p44 = scmp.eq.s32.totalorder %s24, 0
      %p45 = por %p43, %p44
      %p46 = scmp.ne.s32.totalorder %s32, %s33
      %p47 = scmp.eq.s32.totalorder %s25, 1
      %p48 = por %p46, %p47
      %p50 = scmp.ne.s32.totalorder %s33, %s49
      %p51 = scmp.eq.s32.totalorder %s25, 0
      %p52 = por %p50, %p51
      %s54 = sadd.s32 %s53, 1
      %p57 = scmp.eq.s32.totalorder %s19, 1
      %p58 = scmp.ne.s32.totalorder %s53, %s55
      %p59 = scmp.eq.s32.totalorder %s19, 0
      %p60 = por %p58, %p59
      %p61 = scmp.ne.s32.totalorder %s53, %s55
      %p62 = scmp.eq.s32.totalorder %s24, 1
      %p63 = por %p61, %p62
      %p64 = scmp.ne.s32.totalorder %s55, %s56
      %p65 = scmp.eq.s32.totalorder %s24, 0
      %p66 = por %p64, %p65
      %p67 = scmp.ne.s32.totalorder %s55, %s56
      %p68 = scmp.eq.s32.totalorder %s25, 1
      %p69 = por %p67, %p68
      %p71 = scmp.ne.s32.totalorder %s56, %s70
      %p72 = scmp.eq.s32.totalorder %s25, 0
      %p73 = por %p71, %p72
      %s75 = sadd.s32 %s74, 1
      %p78 = scmp.eq.s32.totalorder %s19, 1
      %p79 = scmp.ne.s32.totalorder %s74, %s76
      %p80 = scmp.eq.s32.totalorder %s19, 0
      %p81 = por %p79, %p80
      %p82 = scmp.ne.s32.totalorder %s74, %s76
      %p83 = scmp.eq.s32.totalorder %s24, 1
      %p84 = por %p82, %p83
      %p85 = scmp.ne.s32.totalorder %s76, %s77
      %p86 = scmp.eq.s32.totalorder %s24, 0
      %p87 = por %p85, %p86
      %p88 = scmp.ne.s32.totalorder %s76, %s77
      %p89 = scmp.eq.s32.totalorder %s25, 1
      %p90 = por %p88, %p89
      %p92 = scmp.ne.s32.totalorder %s77, %s91
      %p93 = scmp.eq.s32.totalorder %s25, 0
      %p94 = por %p92, %p93
      %s96 = sadd.s32 %s95, 1
      %p99 = scmp.eq.s32.totalorder %s19, 1
      %p100 = scmp.ne.s32.totalorder %s95, %s97
      %p101 = scmp.eq.s32.totalorder %s19, 0
      %p102 = por %p100, %p101
      %p103 = scmp.ne.s32.totalorder %s95, %s97
      %p104 = scmp.eq.s32.totalorder %s24, 1
      %p105 = por %p103, %p104
      %p106 = scmp.ne.s32.totalorder %s97, %s98
      %p107 = scmp.eq.s32.totalorder %s24, 0
      %p108 = por %p106, %p107
      %p109 = scmp.ne.s32.totalorder %s97, %s98
      %p110 = scmp.eq.s32.totalorder %s25, 1
      %p111 = por %p109, %p110
      %p113 = scmp.ne.s32.totalorder %s98, %s112
      %p114 = scmp.eq.s32.totalorder %s25, 0
      %p115 = por %p113, %p114
      %s117 = sadd.s32 %s116, 1
      %p120 = scmp.eq.s32.totalorder %s19, 1
      %p121 = scmp.ne.s32.totalorder %s116, %s118
      %p122 = scmp.eq.s32.totalorder %s19, 0
      %p123 = por %p121, %p122
      %p124 = scmp.ne.s32.totalorder %s116, %s118
      %p125 = scmp.eq.s32.totalorder %s24, 1
      %p126 = por %p124, %p125
      %p127 = scmp.ne.s32.totalorder %s118, %s119
      %p128 = scmp.eq.s32.totalorder %s24, 0
      %p129 = por %p127, %p128
      %p130 = scmp.ne.s32.totalorder %s118, %s119
      %p131 = scmp.eq.s32.totalorder %s25, 1
      %p132 = por %p130, %p131
      %p134 = scmp.ne.s32.totalorder %s119, %s133
      %p135 = scmp.eq.s32.totalorder %s25, 0
      %p136 = por %p134, %p135
      %s138 = sadd.s32 %s137, 1
      %p141 = scmp.eq.s32.totalorder %s19, 1
      %p142 = scmp.ne.s32.totalorder %s137, %s139
      %p143 = scmp.eq.s32.totalorder %s19, 0
      %p144 = por %p142, %p143
      %p145 = scmp.ne.s32.totalorder %s137, %s139
      %p146 = scmp.eq.s32.totalorder %s24, 1
      %p147 = por %p145, %p146
      %p148 = scmp.ne.s32.totalorder %s139, %s140
      %p149 = scmp.eq.s32.totalorder %s24, 0
      %p150 = por %p148, %p149
      %p151 = scmp.ne.s32.totalorder %s139, %s140
      %p152 = scmp.eq.s32.totalorder %s25, 1
      %p153 = por %p151, %p152
      %p155 = scmp.ne.s32.totalorder %s140, %s154
      %p156 = scmp.eq.s32.totalorder %s25, 0
      %p157 = por %p155, %p156
      %s159 = sadd.s32 %s158, 1
      %p162 = scmp.eq.s32.totalorder %s19, 1
      %p163 = scmp.ne.s32.totalorder %s158, %s160
      %p164 = scmp.eq.s32.totalorder %s19, 0
      %p165 = por %p163, %p164
      %p166 = scmp.ne.s32.totalorder %s158, %s160
      %p167 = scmp.eq.s32.totalorder %s24, 1
      %p168 = por %p166, %p167
      %p169 = scmp.ne.s32.totalorder %s160, %s161
      %p170 = scmp.eq.s32.totalorder %s24, 0
      %p171 = por %p169, %p170
      %p172 = scmp.ne.s32.totalorder %s160, %s161
      %p173 = scmp.eq.s32.totalorder %s25, 1
      %p174 = por %p172, %p173
      %p176 = scmp.ne.s32.totalorder %s161, %s175
      %p177 = scmp.eq.s32.totalorder %s25, 0
      %p178 = por %p176, %p177
      %s180 = sadd.s32 %s179, 1
      %p183 = scmp.eq.s32.totalorder %s19, 1
      %p184 = scmp.ne.s32.totalorder %s179, %s181
      %p185 = scmp.eq.s32.totalorder %s19, 0
      %p186 = por %p184, %p185
      %p187 = scmp.ne.s32.totalorder %s179, %s181
      %p188 = scmp.eq.s32.totalorder %s24, 1
      %p189 = por %p187, %p188
      %p190 = scmp.ne.s32.totalorder %s181, %s182
      %p191 = scmp.eq.s32.totalorder %s24, 0
      %p192 = por %p190, %p191
      %p193 = scmp.ne.s32.totalorder %s181, %s182
      %p194 = scmp.eq.s32.totalorder %s25, 1
      %p195 = por %p193, %p194
      %p197 = scmp.ne.s32.totalorder %s182, %s196
      %p198 = scmp.eq.s32.totalorder %s25, 0
      %p199 = por %p197, %p198
      %s201 = sadd.s32 %s200, 1
      %p204 = scmp.eq.s32.totalorder %s19, 1
      %p205 = scmp.ne.s32.totalorder %s200, %s202
      %p206 = scmp.eq.s32.totalorder %s19, 0
      %p207 = por %p205, %p206
      %p208 = scmp.ne.s32.totalorder %s200, %s202
      %p209 = scmp.eq.s32.totalorder %s24, 1
      %p210 = por %p208, %p209
      %p211 = scmp.ne.s32.totalorder %s202, %s203
      %p212 = scmp.eq.s32.totalorder %s24, 0
      %p213 = por %p211, %p212
      %p214 = scmp.ne.s32.totalorder %s202, %s203
      %p215 = scmp.eq.s32.totalorder %s25, 1
      %p216 = por %p214, %p215
      %p218 = scmp.ne.s32.totalorder %s203, %s217
      %p219 = scmp.eq.s32.totalorder %s25, 0
      %p220 = por %p218, %p219
      %s222 = sadd.s32 %s221, 1
      %p225 = scmp.eq.s32.totalorder %s19, 1
      %p226 = scmp.ne.s32.totalorder %s221, %s223
      %p227 = scmp.eq.s32.totalorder %s19, 0
      %p228 = por %p226, %p227
      %p229 = scmp.ne.s32.totalorder %s221, %s223
      %p230 = scmp.eq.s32.totalorder %s24, 1
      %p231 = por %p229, %p230
      %p232 = scmp.ne.s32.totalorder %s223, %s224
      %p233 = scmp.eq.s32.totalorder %s24, 0
      %p234 = por %p232, %p233
      %p235 = scmp.ne.s32.totalorder %s223, %s224
      %p236 = scmp.eq.s32.totalorder %s25, 1
      %p237 = por %p235, %p236
      %p239 = scmp.ne.s32.totalorder %s224, %s238
      %p240 = scmp.eq.s32.totalorder %s25, 0
      %p241 = por %p239, %p240
      %s242 = ssub.s32 %s19, %s26
      %p243 = scmp.eq.s32.totalorder %s242, 0
      %s245 = sadd.s32 %s244, 1
      %s246 = scalar_select %p243, %s244, %s245
      %p249 = pneg %p243
      %p250 = scmp.eq.s32.totalorder %s19, 1
      %p251 = por %p249, %p250
      %p252 = scmp.ne.s32.totalorder %s244, %s247
      %p253 = scmp.eq.s32.totalorder %s19, 0
      %p254 = por %p252, %p253
      %p255 = scmp.ne.s32.totalorder %s244, %s247
      %p256 = scmp.eq.s32.totalorder %s24, 1
      %p257 = por %p255, %p256
      %p258 = scmp.ne.s32.totalorder %s247, %s248
      %p259 = scmp.eq.s32.totalorder %s24, 0
      %p260 = por %p258, %p259
      %p261 = scmp.ne.s32.totalorder %s247, %s248
      %p262 = scmp.eq.s32.totalorder %s25, 1
      %p263 = por %p261, %p262
      %p265 = scmp.ne.s32.totalorder %s248, %s264
      %p266 = scmp.eq.s32.totalorder %s25, 0
      %p267 = por %p265, %p266
      %p268 = scmp.le.s32.totalorder 1, %s19
      %p269 = scmp.lt.s32.totalorder %s19, 3
      %p270 = pnand %p268, %p269
      %p271 = pneg %p270
      // Predicated region
      $region9: #{tpu_custom_call.1} parent=5 // pred_check
        _
      $region10: #{tpu_custom_call.1} parent=5 // pred_check_branch
        %273 = sbr.rel (%p270) target = $region12
      $region11: #{tpu_custom_call.1} parent=5 // pred_region
        %s274 = ssub.s32 %s19, 1
        // Predicated region
        $region13: #{tpu_custom_call.1} parent=11 // pred_check
          %p275 = pneg %p66
        $region14: #{tpu_custom_call.1} parent=11 // pred_check_branch
          %277 = sbr.rel (%p275) target = $region16
        $region15: #{tpu_custom_call.1} parent=11 // pred_region
          _
        $region16: #{tpu_custom_call.1} parent=11 // pred_fallthru
          _
        // Predicated region
        $region17: #{tpu_custom_call.1} parent=11 // pred_check
          %p278 = pneg %p87
        $region18: #{tpu_custom_call.1} parent=11 // pred_check_branch
          %280 = sbr.rel (%p278) target = $region20
        $region19: #{tpu_custom_call.1} parent=11 // pred_region
          _
        $region20: #{tpu_custom_call.1} parent=11 // pred_fallthru
          _
        // Predicated region
        $region21: #{tpu_custom_call.1} parent=11 // pred_check
          %p281 = pneg %p108
        $region22: #{tpu_custom_call.1} parent=11 // pred_check_branch
          %283 = sbr.rel (%p281) target = $region24
        $region23: #{tpu_custom_call.1} parent=11 // pred_region
          _
        $region24: #{tpu_custom_call.1} parent=11 // pred_fallthru
          _
        // Predicated region
        $region25: #{tpu_custom_call.1} parent=11 // pred_check
          %p284 = pneg %p129
        $region26: #{tpu_custom_call.1} parent=11 // pred_check_branch
          %286 = sbr.rel (%p284) target = $region28
        $region27: #{tpu_custom_call.1} parent=11 // pred_region
          _
        $region28: #{tpu_custom_call.1} parent=11 // pred_fallthru
          _
        // Predicated region
        $region29: #{tpu_custom_call.1} parent=11 // pred_check
          %p287 = pneg %p150
        $region30: #{tpu_custom_call.1} parent=11 // pred_check_branch
          %289 = sbr.rel (%p287) target = $region32
        $region31: #{tpu_custom_call.1} parent=11 // pred_region
          _
        $region32: #{tpu_custom_call.1} parent=11 // pred_fallthru
          _
        // Predicated region
        $region33: #{tpu_custom_call.1} parent=11 // pred_check
          %p290 = pneg %p171
        $region34: #{tpu_custom_call.1} parent=11 // pred_check_branch
          %292 = sbr.rel (%p290) target = $region36
        $region35: #{tpu_custom_call.1} parent=11 // pred_region
          _
        $region36: #{tpu_custom_call.1} parent=11 // pred_fallthru
          _
        // Predicated region
        $region37: #{tpu_custom_call.1} parent=11 // pred_check
          %p293 = pneg %p192
        $region38: #{tpu_custom_call.1} parent=11 // pred_check_branch
          %295 = sbr.rel (%p293) target = $region40
        $region39: #{tpu_custom_call.1} parent=11 // pred_region
          _
        $region40: #{tpu_custom_call.1} parent=11 // pred_fallthru
          _
        // Predicated region
        $region41: #{tpu_custom_call.1} parent=11 // pred_check
          %p296 = pneg %p213
        $region42: #{tpu_custom_call.1} parent=11 // pred_check_branch
          %298 = sbr.rel (%p296) target = $region44
        $region43: #{tpu_custom_call.1} parent=11 // pred_region
          _
        $region44: #{tpu_custom_call.1} parent=11 // pred_fallthru
          _
        // Predicated region
        $region45: #{tpu_custom_call.1} parent=11 // pred_check
          %p299 = pneg %p234
        $region46: #{tpu_custom_call.1} parent=11 // pred_check_branch
          %301 = sbr.rel (%p299) target = $region48
        $region47: #{tpu_custom_call.1} parent=11 // pred_region
          _
        $region48: #{tpu_custom_call.1} parent=11 // pred_fallthru
          _
      $region12: #{tpu_custom_call.1} parent=5 // pred_fallthru
        _
      %p302 = scmp.lt.s32.totalorder %s19, 2
      // Predicated region
      $region49: #{tpu_custom_call.1} parent=5 // pred_check
        %p303 = pneg %p302
      $region50: #{tpu_custom_call.1} parent=5 // pred_check_branch
        %305 = sbr.rel (%p303) target = $region52
      $region51: #{tpu_custom_call.1} parent=5 // pred_region
        // Predicated region
        $region53: #{tpu_custom_call.1} parent=51 // pred_check
          %p306 = pneg %p39
        $region54: #{tpu_custom_call.1} parent=51 // pred_check_branch
          %308 = sbr.rel (%p306) target = $region56
        $region55: #{tpu_custom_call.1} parent=51 // pred_region
          %p309 = scmp.lt.s32.totalorder %s19, 1
          %s310 = scalar_select %p309, %s19, 1
          %s311 = smul.addr %s310, 2
          %s312 = smul.addr %s311, 8
          %s313 = scalar_lea.vmem %s0, %s312
        $region56: #{tpu_custom_call.1} parent=51 // pred_fallthru
          _
      $region52: #{tpu_custom_call.1} parent=5 // pred_fallthru
        _
      %p314 = scmp.le.s32.totalorder 1, %s19
      %p315 = scmp.lt.s32.totalorder %s19, 3
      %p316 = pnand %p314, %p315
      %p317 = pneg %p316
      // Predicated region
      $region57: #{tpu_custom_call.1} parent=5 // pred_check
        _
      $region58: #{tpu_custom_call.1} parent=5 // pred_check_branch
        %319 = sbr.rel (%p316) target = $region60
      $region59: #{tpu_custom_call.1} parent=5 // pred_region
        %s320 = ssub.s32 %s19, 1
        %p321 = scmp.lt.s32.totalorder %s24, 1
        %s322 = scalar_select %p321, %s24, 1
        %s323 = smul.addr %s322, 2
        %s324 = smul.addr %s323, 8
        %s325 = scalar_lea.vmem %s0, %s324
        %p326 = pneg %p45
        %p327 = pneg %p42
        %p328 = pneg %p66
        %p329 = pneg %p63
        %p330 = pneg %p87
        %p331 = pneg %p84
        %p332 = pneg %p108
        %p333 = pneg %p105
        %p334 = pneg %p129
        %p335 = pneg %p126
        %p336 = pneg %p150
        %p337 = pneg %p147
        %p338 = pneg %p171
        %p339 = pneg %p168
        %p340 = pneg %p192
        %p341 = pneg %p189
        %p342 = pneg %p213
        %p343 = pneg %p210
        %p344 = pneg %p234
        %p345 = pneg %p231
        %p346 = pneg %p260
        %p347 = pneg %p257
        %s348 = sand.u32 %s247, 1
        %s349 = scalar_lea.sflag [#allocation4], %s348
        %s350 = sand.u32 %s247, 1
        %s351 = smul.addr %s350, 16
        %s352 = scalar_lea.vmem [#allocation3], %s351
        %p353 = scmp.lt.s32.totalorder %s24, 1
        %s354 = scalar_select %p353, %s24, 1
        %s355 = smul.addr %s354, 2
        %s356 = smul.addr %s355, 8
        %s357 = scalar_lea.vmem %s0, %s356
        %v358 = vld [vmem:[%s357] sm:$0xff]
        %v359 = vld [vmem:[%s357 + $0x8] sm:$0xff]
        %vm360 = vcmask 523264
        %361 = vst.msk [vmem:[#allocation2] sm:$0xff] %vm360, 0.0
        %vm362 = vcmask 1048064
        %363 = vst.msk [vmem:[#allocation2 + $0x10] sm:$0xff] %vm362, 0.0
        %366 = vrot.lane.b32.xlu0 %v358, 64
        %v367 = vpop.permute.xlu0 %366
        %368 = vrot.lane.b32.xlu0 %v359, 64
        %v369 = vpop.permute.xlu0 %368
        %v370 = vsel %vm360, %v367, %v369
        %374 = vst.msk [vmem:[#allocation2] sm:$0xff] %vm362, %v367
        %375 = vst [vmem:[#allocation2 + $0x8] sm:$0xff] %v370
        %376 = vst.msk [vmem:[#allocation2 + $0x10] sm:$0xff] %vm360, %v369
        %v377 = vld [vmem:[#allocation2] sm:$0xff]
        %v378 = vld [vmem:[#allocation2 + $0x8] sm:$0xff]
        %v379 = vld [vmem:[#allocation2 + $0x10] sm:$0xff]
        %v380 = vlaneseq
        %v381 = vand.u32 %v380, 127
        %v382 = vadd.s32 %v381, 128
        %v383 = vand.u32 %v381, 15
        %v384 = vand.u32 %v382, 15
        %vm385 = vcmp.ge.s32.totalorder %v383, 3
        %vm386 = vcmp.ge.s32.totalorder %v384, 3
        %vm387 = vcmp.lt.s32.totalorder %v383, 19
        %vm388 = vcmp.lt.s32.totalorder %v384, 19
        %vm389 = vmand %vm385, %vm387
        %vm390 = vmand %vm386, %vm388
        %v391 = vsel %vm389, 1, 0
        %v392 = vsel %vm390, 1, 0
        %v393 = vcvt.s32.f32 %v391
        %v394 = vcvt.s32.f32 %v392
        %vm395 = vcmp.ge.s32.totalorder %v383, 2
        %vm396 = vcmp.ge.s32.totalorder %v384, 2
        %vm397 = vcmp.lt.s32.totalorder %v383, 18
        %vm398 = vcmp.lt.s32.totalorder %v384, 18
        %vm399 = vmand %vm395, %vm397
        %vm400 = vmand %vm396, %vm398
        %v401 = vsel %vm399, 1, 0
        %v402 = vsel %vm400, 1, 0
        %v403 = vcvt.s32.f32 %v401
        %v404 = vcvt.s32.f32 %v402
        %vm405 = vcmp.ge.s32.totalorder %v383, 1
        %vm406 = vcmp.ge.s32.totalorder %v384, 1
        %vm407 = vcmp.lt.s32.totalorder %v383, 17
        %vm408 = vcmp.lt.s32.totalorder %v384, 17
        %vm409 = vmand %vm405, %vm407
        %vm410 = vmand %vm406, %vm408
        %v411 = vsel %vm409, 1, 0
        %v412 = vsel %vm410, 1, 0
        %v413 = vcvt.s32.f32 %v411
        %v414 = vcvt.s32.f32 %v412
        %vm415 = vcmp.ge.s32.totalorder %v383, 4294967295
        %vm416 = vcmp.ge.s32.totalorder %v384, 4294967295
        %vm417 = vcmp.lt.s32.totalorder %v383, 15
        %vm418 = vcmp.lt.s32.totalorder %v384, 15
        %vm419 = vmand %vm415, %vm417
        %vm420 = vmand %vm416, %vm418
        %v421 = vsel %vm419, 1, 0
        %v422 = vsel %vm420, 1, 0
        %v423 = vcvt.s32.f32 %v421
        %v424 = vcvt.s32.f32 %v422
        %vm425 = vcmp.ge.s32.totalorder %v383, 4294967294
        %vm426 = vcmp.ge.s32.totalorder %v384, 4294967294
        %vm427 = vcmp.lt.s32.totalorder %v383, 14
        %vm428 = vcmp.lt.s32.totalorder %v384, 14
        %vm429 = vmand %vm425, %vm427
        %vm430 = vmand %vm426, %vm428
        %v431 = vsel %vm429, 1, 0
        %v432 = vsel %vm430, 1, 0
        %v433 = vcvt.s32.f32 %v431
        %v434 = vcvt.s32.f32 %v432
        %vm435 = vcmp.ge.s32.totalorder %v383, 4294967293
        %vm436 = vcmp.ge.s32.totalorder %v384, 4294967293
        %vm437 = vcmp.lt.s32.totalorder %v383, 13
        %vm438 = vcmp.lt.s32.totalorder %v384, 13
        %vm439 = vmand %vm435, %vm437
        %vm440 = vmand %vm436, %vm438
        %v441 = vsel %vm439, 1, 0
        %v442 = vsel %vm440, 1, 0
        %v443 = vcvt.s32.f32 %v441
        %v444 = vcvt.s32.f32 %v442
        %445 = vrot.lane.b32.xlu0 %v377, 115
        %v446 = vpop.permute.xlu0 %445
        %447 = vrot.lane.b32.xlu0 %v378, 115
        %v448 = vpop.permute.xlu0 %447
        %449 = vrot.lane.b32.xlu0 %v379, 115
        %v450 = vpop.permute.xlu0 %449
        %vm451 = vcmp.lt.s32.totalorder %v381, 115
        %v452 = vsel %vm451, %v448, %v450
        %v453 = vsel %vm451, %v446, %v448
        %v454 = vld [vmem:[%s1] sm:$0xff]
        %456 = vset.pattern.permute.xlu0 0
        %457 = vperm.xlu0 %456, %v454
        %v458 = vpop.permute.xlu0 %457
        %v460 = vmul.f32 %v453, %v458
        %v461 = vmul.f32 %v452, %v458
        %v462 = vadd.f32 %v460, 0.0
        %v463 = vadd.f32 %v461, 0.0
        %464 = vrot.lane.b32.xlu0 %v377, 99
        %v465 = vpop.permute.xlu0 %464
        %466 = vrot.lane.b32.xlu0 %v378, 99
        %v467 = vpop.permute.xlu0 %466
        %468 = vrot.lane.b32.xlu0 %v379, 99
        %v469 = vpop.permute.xlu0 %468
        %vm470 = vcmp.lt.s32.totalorder %v381, 99
        %v471 = vsel %vm470, %v467, %v469
        %v472 = vsel %vm470, %v465, %v467
        %473 = vset.pattern.permute.xlu0 7
        %474 = vperm.xlu0 %473, %v454
        %v475 = vpop.permute.xlu0 %474
        %v477 = vmul.f32 %v472, %v475
        %v478 = vmul.f32 %v471, %v475
        %v479 = vadd.f32 %v462, %v477
        %v480 = vadd.f32 %v463, %v478
        %481 = vrot.lane.b32.xlu0 %v377, 83
        %v482 = vpop.permute.xlu0 %481
        %483 = vrot.lane.b32.xlu0 %v378, 83
        %v484 = vpop.permute.xlu0 %483
        %485 = vrot.lane.b32.xlu0 %v379, 83
        %v486 = vpop.permute.xlu0 %485
        %vm487 = vcmp.lt.s32.totalorder %v381, 83
        %v488 = vsel %vm487, %v484, %v486
        %v489 = vsel %vm487, %v482, %v484
        %490 = vset.pattern.permute.xlu0 14
        %491 = vperm.xlu0 %490, %v454
        %v492 = vpop.permute.xlu0 %491
        %v494 = vmul.f32 %v489, %v492
        %v495 = vmul.f32 %v488, %v492
        %v496 = vadd.f32 %v479, %v494
        %v497 = vadd.f32 %v480, %v495
        %498 = vrot.lane.b32.xlu0 %v377, 67
        %v499 = vpop.permute.xlu0 %498
        %500 = vrot.lane.b32.xlu0 %v378, 67
        %v501 = vpop.permute.xlu0 %500
        %502 = vrot.lane.b32.xlu0 %v379, 67
        %v503 = vpop.permute.xlu0 %502
        %vm504 = vcmp.lt.s32.totalorder %v381, 67
        %v505 = vsel %vm504, %v501, %v503
        %v506 = vsel %vm504, %v499, %v501
        %507 = vset.pattern.permute.xlu0 21
        %508 = vperm.xlu0 %507, %v454
        %v509 = vpop.permute.xlu0 %508
        %v511 = vmul.f32 %v506, %v509
        %v512 = vmul.f32 %v505, %v509
        %v513 = vadd.f32 %v496, %v511
        %v514 = vadd.f32 %v497, %v512
        %515 = vrot.lane.b32.xlu0 %v377, 51
        %v516 = vpop.permute.xlu0 %515
        %517 = vrot.lane.b32.xlu0 %v378, 51
        %v518 = vpop.permute.xlu0 %517
        %519 = vrot.lane.b32.xlu0 %v379, 51
        %v520 = vpop.permute.xlu0 %519
        %vm521 = vcmp.lt.s32.totalorder %v381, 51
        %v522 = vsel %vm521, %v518, %v520
        %v523 = vsel %vm521, %v516, %v518
        %524 = vset.pattern.permute.xlu0 28
        %525 = vperm.xlu0 %524, %v454
        %v526 = vpop.permute.xlu0 %525
        %v528 = vmul.f32 %v523, %v526
        %v529 = vmul.f32 %v522, %v526
        %v530 = vadd.f32 %v513, %v528
        %v531 = vadd.f32 %v514, %v529
        %532 = vrot.lane.b32.xlu0 %v377, 35
        %v533 = vpop.permute.xlu0 %532
        %534 = vrot.lane.b32.xlu0 %v378, 35
        %v535 = vpop.permute.xlu0 %534
        %536 = vrot.lane.b32.xlu0 %v379, 35
        %v537 = vpop.permute.xlu0 %536
        %vm538 = vcmp.lt.s32.totalorder %v381, 35
        %v539 = vsel %vm538, %v535, %v537
        %v540 = vsel %vm538, %v533, %v535
        %541 = vset.pattern.permute.xlu0 35
        %542 = vperm.xlu0 %541, %v454
        %v543 = vpop.permute.xlu0 %542
        %v545 = vmul.f32 %v540, %v543
        %v546 = vmul.f32 %v539, %v543
        %v547 = vadd.f32 %v530, %v545
        %v548 = vadd.f32 %v531, %v546
        %549 = vrot.lane.b32.xlu0 %v377, 19
        %v550 = vpop.permute.xlu0 %549
        %551 = vrot.lane.b32.xlu0 %v378, 19
        %v552 = vpop.permute.xlu0 %551
        %553 = vrot.lane.b32.xlu0 %v379, 19
        %v554 = vpop.permute.xlu0 %553
        %vm555 = vcmp.lt.s32.totalorder %v381, 19
        %v556 = vsel %vm555, %v552, %v554
        %v557 = vsel %vm555, %v550, %v552
        %558 = vset.pattern.permute.xlu0 42
        %559 = vperm.xlu0 %558, %v454
        %v560 = vpop.permute.xlu0 %559
        %v562 = vmul.f32 %v557, %v560
        %v563 = vmul.f32 %v556, %v560
        %v564 = vadd.f32 %v547, %v562
        %v565 = vadd.f32 %v548, %v563
        %v566 = vmul.f32 %v564, %v393
        %v567 = vmul.f32 %v565, %v394
        %v568 = vadd.f32 %v566, 0.0
        %v569 = vadd.f32 %v567, 0.0
        %570 = vrot.lane.b32.xlu0 %v377, 114
        %v571 = vpop.permute.xlu0 %570
        %572 = vrot.lane.b32.xlu0 %v378, 114
        %v573 = vpop.permute.xlu0 %572
        %574 = vrot.lane.b32.xlu0 %v379, 114
        %v575 = vpop.permute.xlu0 %574
        %vm576 = vcmp.lt.s32.totalorder %v381, 114
        %v577 = vsel %vm576, %v573, %v575
        %v578 = vsel %vm576, %v571, %v573
        %579 = vset.pattern.permute.xlu0 1
        %580 = vperm.xlu0 %579, %v454
        %v581 = vpop.permute.xlu0 %580
        %v583 = vmul.f32 %v578, %v581
        %v584 = vmul.f32 %v577, %v581
        %v585 = vadd.f32 %v583, 0.0
        %v586 = vadd.f32 %v584, 0.0
        %587 = vrot.lane.b32.xlu0 %v377, 98
        %v588 = vpop.permute.xlu0 %587
        %589 = vrot.lane.b32.xlu0 %v378, 98
        %v590 = vpop.permute.xlu0 %589
        %591 = vrot.lane.b32.xlu0 %v379, 98
        %v592 = vpop.permute.xlu0 %591
        %vm593 = vcmp.lt.s32.totalorder %v381, 98
        %v594 = vsel %vm593, %v590, %v592
        %v595 = vsel %vm593, %v588, %v590
        %596 = vset.pattern.permute.xlu0 8
        %597 = vperm.xlu0 %596, %v454
        %v598 = vpop.permute.xlu0 %597
        %v600 = vmul.f32 %v595, %v598
        %v601 = vmul.f32 %v594, %v598
        %v602 = vadd.f32 %v585, %v600
        %v603 = vadd.f32 %v586, %v601
        %604 = vrot.lane.b32.xlu0 %v377, 82
        %v605 = vpop.permute.xlu0 %604
        %606 = vrot.lane.b32.xlu0 %v378, 82
        %v607 = vpop.permute.xlu0 %606
        %608 = vrot.lane.b32.xlu0 %v379, 82
        %v609 = vpop.permute.xlu0 %608
        %vm610 = vcmp.lt.s32.totalorder %v381, 82
        %v611 = vsel %vm610, %v607, %v609
        %v612 = vsel %vm610, %v605, %v607
        %613 = vset.pattern.permute.xlu0 15
        %614 = vperm.xlu0 %613, %v454
        %v615 = vpop.permute.xlu0 %614
        %v617 = vmul.f32 %v612, %v615
        %v618 = vmul.f32 %v611, %v615
        %v619 = vadd.f32 %v602, %v617
        %v620 = vadd.f32 %v603, %v618
        %621 = vrot.lane.b32.xlu0 %v377, 66
        %v622 = vpop.permute.xlu0 %621
        %623 = vrot.lane.b32.xlu0 %v378, 66
        %v624 = vpop.permute.xlu0 %623
        %625 = vrot.lane.b32.xlu0 %v379, 66
        %v626 = vpop.permute.xlu0 %625
        %vm627 = vcmp.lt.s32.totalorder %v381, 66
        %v628 = vsel %vm627, %v624, %v626
        %v629 = vsel %vm627, %v622, %v624
        %630 = vset.pattern.permute.xlu0 22
        %631 = vperm.xlu0 %630, %v454
        %v632 = vpop.permute.xlu0 %631
        %v634 = vmul.f32 %v629, %v632
        %v635 = vmul.f32 %v628, %v632
        %v636 = vadd.f32 %v619, %v634
        %v637 = vadd.f32 %v620, %v635
        %638 = vrot.lane.b32.xlu0 %v377, 50
        %v639 = vpop.permute.xlu0 %638
        %640 = vrot.lane.b32.xlu0 %v378, 50
        %v641 = vpop.permute.xlu0 %640
        %642 = vrot.lane.b32.xlu0 %v379, 50
        %v643 = vpop.permute.xlu0 %642
        %vm644 = vcmp.lt.s32.totalorder %v381, 50
        %v645 = vsel %vm644, %v641, %v643
        %v646 = vsel %vm644, %v639, %v641
        %647 = vset.pattern.permute.xlu0 29
        %648 = vperm.xlu0 %647, %v454
        %v649 = vpop.permute.xlu0 %648
        %v651 = vmul.f32 %v646, %v649
        %v652 = vmul.f32 %v645, %v649
        %v653 = vadd.f32 %v636, %v651
        %v654 = vadd.f32 %v637, %v652
        %655 = vrot.lane.b32.xlu0 %v377, 34
        %v656 = vpop.permute.xlu0 %655
        %657 = vrot.lane.b32.xlu0 %v378, 34
        %v658 = vpop.permute.xlu0 %657
        %659 = vrot.lane.b32.xlu0 %v379, 34
        %v660 = vpop.permute.xlu0 %659
        %vm661 = vcmp.lt.s32.totalorder %v381, 34
        %v662 = vsel %vm661, %v658, %v660
        %v663 = vsel %vm661, %v656, %v658
        %664 = vset.pattern.permute.xlu0 36
        %665 = vperm.xlu0 %664, %v454
        %v666 = vpop.permute.xlu0 %665
        %v668 = vmul.f32 %v663, %v666
        %v669 = vmul.f32 %v662, %v666
        %v670 = vadd.f32 %v653, %v668
        %v671 = vadd.f32 %v654, %v669
        %672 = vrot.lane.b32.xlu0 %v377, 18
        %v673 = vpop.permute.xlu0 %672
        %674 = vrot.lane.b32.xlu0 %v378, 18
        %v675 = vpop.permute.xlu0 %674
        %676 = vrot.lane.b32.xlu0 %v379, 18
        %v677 = vpop.permute.xlu0 %676
        %vm678 = vcmp.lt.s32.totalorder %v381, 18
        %v679 = vsel %vm678, %v675, %v677
        %v680 = vsel %vm678, %v673, %v675
        %681 = vset.pattern.permute.xlu0 43
        %682 = vperm.xlu0 %681, %v454
        %v683 = vpop.permute.xlu0 %682
        %v685 = vmul.f32 %v680, %v683
        %v686 = vmul.f32 %v679, %v683
        %v687 = vadd.f32 %v670, %v685
        %v688 = vadd.f32 %v671, %v686
        %v689 = vmul.f32 %v687, %v403
        %v690 = vmul.f32 %v688, %v404
        %v691 = vadd.f32 %v568, %v689
        %v692 = vadd.f32 %v569, %v690
        %693 = vrot.lane.b32.xlu0 %v377, 113
        %v694 = vpop.permute.xlu0 %693
        %695 = vrot.lane.b32.xlu0 %v378, 113
        %v696 = vpop.permute.xlu0 %695
        %697 = vrot.lane.b32.xlu0 %v379, 113
        %v698 = vpop.permute.xlu0 %697
        %vm699 = vcmp.lt.s32.totalorder %v381, 113
        %v700 = vsel %vm699, %v696, %v698
        %v701 = vsel %vm699, %v694, %v696
        %702 = vset.pattern.permute.xlu0 2
        %703 = vperm.xlu0 %702, %v454
        %v704 = vpop.permute.xlu0 %703
        %v706 = vmul.f32 %v701, %v704
        %v707 = vmul.f32 %v700, %v704
        %v708 = vadd.f32 %v706, 0.0
        %v709 = vadd.f32 %v707, 0.0
        %710 = vrot.lane.b32.xlu0 %v377, 97
        %v711 = vpop.permute.xlu0 %710
        %712 = vrot.lane.b32.xlu0 %v378, 97
        %v713 = vpop.permute.xlu0 %712
        %714 = vrot.lane.b32.xlu0 %v379, 97
        %v715 = vpop.permute.xlu0 %714
        %vm716 = vcmp.lt.s32.totalorder %v381, 97
        %v717 = vsel %vm716, %v713, %v715
        %v718 = vsel %vm716, %v711, %v713
        %719 = vset.pattern.permute.xlu0 9
        %720 = vperm.xlu0 %719, %v454
        %v721 = vpop.permute.xlu0 %720
        %v723 = vmul.f32 %v718, %v721
        %v724 = vmul.f32 %v717, %v721
        %v725 = vadd.f32 %v708, %v723
        %v726 = vadd.f32 %v709, %v724
        %727 = vrot.lane.b32.xlu0 %v377, 81
        %v728 = vpop.permute.xlu0 %727
        %729 = vrot.lane.b32.xlu0 %v378, 81
        %v730 = vpop.permute.xlu0 %729
        %731 = vrot.lane.b32.xlu0 %v379, 81
        %v732 = vpop.permute.xlu0 %731
        %vm733 = vcmp.lt.s32.totalorder %v381, 81
        %v734 = vsel %vm733, %v730, %v732
        %v735 = vsel %vm733, %v728, %v730
        %736 = vset.pattern.permute.xlu0 16
        %737 = vperm.xlu0 %736, %v454
        %v738 = vpop.permute.xlu0 %737
        %v740 = vmul.f32 %v735, %v738
        %v741 = vmul.f32 %v734, %v738
        %v742 = vadd.f32 %v725, %v740
        %v743 = vadd.f32 %v726, %v741
        %744 = vrot.lane.b32.xlu0 %v377, 65
        %v745 = vpop.permute.xlu0 %744
        %746 = vrot.lane.b32.xlu0 %v378, 65
        %v747 = vpop.permute.xlu0 %746
        %748 = vrot.lane.b32.xlu0 %v379, 65
        %v749 = vpop.permute.xlu0 %748
        %vm750 = vcmp.lt.s32.totalorder %v381, 65
        %v751 = vsel %vm750, %v747, %v749
        %v752 = vsel %vm750, %v745, %v747
        %753 = vset.pattern.permute.xlu0 23
        %754 = vperm.xlu0 %753, %v454
        %v755 = vpop.permute.xlu0 %754
        %v757 = vmul.f32 %v752, %v755
        %v758 = vmul.f32 %v751, %v755
        %v759 = vadd.f32 %v742, %v757
        %v760 = vadd.f32 %v743, %v758
        %761 = vrot.lane.b32.xlu0 %v377, 49
        %v762 = vpop.permute.xlu0 %761
        %763 = vrot.lane.b32.xlu0 %v378, 49
        %v764 = vpop.permute.xlu0 %763
        %765 = vrot.lane.b32.xlu0 %v379, 49
        %v766 = vpop.permute.xlu0 %765
        %vm767 = vcmp.lt.s32.totalorder %v381, 49
        %v768 = vsel %vm767, %v764, %v766
        %v769 = vsel %vm767, %v762, %v764
        %770 = vset.pattern.permute.xlu0 30
        %771 = vperm.xlu0 %770, %v454
        %v772 = vpop.permute.xlu0 %771
        %v774 = vmul.f32 %v769, %v772
        %v775 = vmul.f32 %v768, %v772
        %v776 = vadd.f32 %v759, %v774
        %v777 = vadd.f32 %v760, %v775
        %778 = vrot.lane.b32.xlu0 %v377, 33
        %v779 = vpop.permute.xlu0 %778
        %780 = vrot.lane.b32.xlu0 %v378, 33
        %v781 = vpop.permute.xlu0 %780
        %782 = vrot.lane.b32.xlu0 %v379, 33
        %v783 = vpop.permute.xlu0 %782
        %vm784 = vcmp.lt.s32.totalorder %v381, 33
        %v785 = vsel %vm784, %v781, %v783
        %v786 = vsel %vm784, %v779, %v781
        %787 = vset.pattern.permute.xlu0 37
        %788 = vperm.xlu0 %787, %v454
        %v789 = vpop.permute.xlu0 %788
        %v791 = vmul.f32 %v786, %v789
        %v792 = vmul.f32 %v785, %v789
        %v793 = vadd.f32 %v776, %v791
        %v794 = vadd.f32 %v777, %v792
        %795 = vrot.lane.b32.xlu0 %v377, 17
        %v796 = vpop.permute.xlu0 %795
        %797 = vrot.lane.b32.xlu0 %v378, 17
        %v798 = vpop.permute.xlu0 %797
        %799 = vrot.lane.b32.xlu0 %v379, 17
        %v800 = vpop.permute.xlu0 %799
        %vm801 = vcmp.lt.s32.totalorder %v381, 17
        %v802 = vsel %vm801, %v798, %v800
        %v803 = vsel %vm801, %v796, %v798
        %804 = vset.pattern.permute.xlu0 44
        %805 = vperm.xlu0 %804, %v454
        %v806 = vpop.permute.xlu0 %805
        %v808 = vmul.f32 %v803, %v806
        %v809 = vmul.f32 %v802, %v806
        %v810 = vadd.f32 %v793, %v808
        %v811 = vadd.f32 %v794, %v809
        %v812 = vmul.f32 %v810, %v413
        %v813 = vmul.f32 %v811, %v414
        %v814 = vadd.f32 %v691, %v812
        %v815 = vadd.f32 %v692, %v813
        %816 = vrot.lane.b32.xlu0 %v377, 112
        %v817 = vpop.permute.xlu0 %816
        %818 = vrot.lane.b32.xlu0 %v378, 112
        %v819 = vpop.permute.xlu0 %818
        %820 = vrot.lane.b32.xlu0 %v379, 112
        %v821 = vpop.permute.xlu0 %820
        %vm822 = vcmp.lt.s32.totalorder %v381, 112
        %v823 = vsel %vm822, %v819, %v821
        %v824 = vsel %vm822, %v817, %v819
        %825 = vset.pattern.permute.xlu0 3
        %826 = vperm.xlu0 %825, %v454
        %v827 = vpop.permute.xlu0 %826
        %v829 = vmul.f32 %v824, %v827
        %v830 = vmul.f32 %v823, %v827
        %v831 = vadd.f32 %v829, 0.0
        %v832 = vadd.f32 %v830, 0.0
        %833 = vrot.lane.b32.xlu0 %v377, 96
        %v834 = vpop.permute.xlu0 %833
        %835 = vrot.lane.b32.xlu0 %v378, 96
        %v836 = vpop.permute.xlu0 %835
        %837 = vrot.lane.b32.xlu0 %v379, 96
        %v838 = vpop.permute.xlu0 %837
        %vm839 = vcmp.lt.s32.totalorder %v381, 96
        %v840 = vsel %vm839, %v836, %v838
        %v841 = vsel %vm839, %v834, %v836
        %842 = vset.pattern.permute.xlu0 10
        %843 = vperm.xlu0 %842, %v454
        %v844 = vpop.permute.xlu0 %843
        %v846 = vmul.f32 %v841, %v844
        %v847 = vmul.f32 %v840, %v844
        %v848 = vadd.f32 %v831, %v846
        %v849 = vadd.f32 %v832, %v847
        %850 = vrot.lane.b32.xlu0 %v377, 80
        %v851 = vpop.permute.xlu0 %850
        %852 = vrot.lane.b32.xlu0 %v378, 80
        %v853 = vpop.permute.xlu0 %852
        %854 = vrot.lane.b32.xlu0 %v379, 80
        %v855 = vpop.permute.xlu0 %854
        %vm856 = vcmp.lt.s32.totalorder %v381, 80
        %v857 = vsel %vm856, %v853, %v855
        %v858 = vsel %vm856, %v851, %v853
        %859 = vset.pattern.permute.xlu0 17
        %860 = vperm.xlu0 %859, %v454
        %v861 = vpop.permute.xlu0 %860
        %v863 = vmul.f32 %v858, %v861
        %v864 = vmul.f32 %v857, %v861
        %v865 = vadd.f32 %v848, %v863
        %v866 = vadd.f32 %v849, %v864
        %867 = vrot.lane.b32.xlu0 %v377, 64
        %v868 = vpop.permute.xlu0 %867
        %869 = vrot.lane.b32.xlu0 %v378, 64
        %v870 = vpop.permute.xlu0 %869
        %871 = vrot.lane.b32.xlu0 %v379, 64
        %v872 = vpop.permute.xlu0 %871
        %vm873 = vcmp.lt.s32.totalorder %v381, 64
        %v874 = vsel %vm873, %v870, %v872
        %v875 = vsel %vm873, %v868, %v870
        %876 = vset.pattern.permute.xlu0 24
        %877 = vperm.xlu0 %876, %v454
        %v878 = vpop.permute.xlu0 %877
        %v880 = vmul.f32 %v875, %v878
        %v881 = vmul.f32 %v874, %v878
        %v882 = vadd.f32 %v865, %v880
        %v883 = vadd.f32 %v866, %v881
        %884 = vrot.lane.b32.xlu0 %v377, 48
        %v885 = vpop.permute.xlu0 %884
        %886 = vrot.lane.b32.xlu0 %v378, 48
        %v887 = vpop.permute.xlu0 %886
        %888 = vrot.lane.b32.xlu0 %v379, 48
        %v889 = vpop.permute.xlu0 %888
        %vm890 = vcmp.lt.s32.totalorder %v381, 48
        %v891 = vsel %vm890, %v887, %v889
        %v892 = vsel %vm890, %v885, %v887
        %893 = vset.pattern.permute.xlu0 31
        %894 = vperm.xlu0 %893, %v454
        %v895 = vpop.permute.xlu0 %894
        %v897 = vmul.f32 %v892, %v895
        %v898 = vmul.f32 %v891, %v895
        %v899 = vadd.f32 %v882, %v897
        %v900 = vadd.f32 %v883, %v898
        %901 = vrot.lane.b32.xlu0 %v377, 32
        %v902 = vpop.permute.xlu0 %901
        %903 = vrot.lane.b32.xlu0 %v378, 32
        %v904 = vpop.permute.xlu0 %903
        %905 = vrot.lane.b32.xlu0 %v379, 32
        %v906 = vpop.permute.xlu0 %905
        %vm907 = vcmp.lt.s32.totalorder %v381, 32
        %v908 = vsel %vm907, %v904, %v906
        %v909 = vsel %vm907, %v902, %v904
        %910 = vset.pattern.permute.xlu0 38
        %911 = vperm.xlu0 %910, %v454
        %v912 = vpop.permute.xlu0 %911
        %v914 = vmul.f32 %v909, %v912
        %v915 = vmul.f32 %v908, %v912
        %v916 = vadd.f32 %v899, %v914
        %v917 = vadd.f32 %v900, %v915
        %918 = vrot.lane.b32.xlu0 %v377, 16
        %v919 = vpop.permute.xlu0 %918
        %920 = vrot.lane.b32.xlu0 %v378, 16
        %v921 = vpop.permute.xlu0 %920
        %922 = vrot.lane.b32.xlu0 %v379, 16
        %v923 = vpop.permute.xlu0 %922
        %vm924 = vcmp.lt.s32.totalorder %v381, 16
        %v925 = vsel %vm924, %v921, %v923
        %v926 = vsel %vm924, %v919, %v921
        %927 = vset.pattern.permute.xlu0 45
        %928 = vperm.xlu0 %927, %v454
        %v929 = vpop.permute.xlu0 %928
        %v931 = vmul.f32 %v926, %v929
        %v932 = vmul.f32 %v925, %v929
        %v933 = vadd.f32 %v916, %v931
        %v934 = vadd.f32 %v917, %v932
        %v935 = vadd.f32 %v814, %v933
        %v936 = vadd.f32 %v815, %v934
        %937 = vrot.lane.b32.xlu0 %v377, 111
        %v938 = vpop.permute.xlu0 %937
        %939 = vrot.lane.b32.xlu0 %v378, 111
        %v940 = vpop.permute.xlu0 %939
        %941 = vrot.lane.b32.xlu0 %v379, 111
        %v942 = vpop.permute.xlu0 %941
        %vm943 = vcmp.lt.s32.totalorder %v381, 111
        %v944 = vsel %vm943, %v940, %v942
        %v945 = vsel %vm943, %v938, %v940
        %946 = vset.pattern.permute.xlu0 4
        %947 = vperm.xlu0 %946, %v454
        %v948 = vpop.permute.xlu0 %947
        %v950 = vmul.f32 %v945, %v948
        %v951 = vmul.f32 %v944, %v948
        %v952 = vadd.f32 %v950, 0.0
        %v953 = vadd.f32 %v951, 0.0
        %954 = vrot.lane.b32.xlu0 %v377, 95
        %v955 = vpop.permute.xlu0 %954
        %956 = vrot.lane.b32.xlu0 %v378, 95
        %v957 = vpop.permute.xlu0 %956
        %958 = vrot.lane.b32.xlu0 %v379, 95
        %v959 = vpop.permute.xlu0 %958
        %vm960 = vcmp.lt.s32.totalorder %v381, 95
        %v961 = vsel %vm960, %v957, %v959
        %v962 = vsel %vm960, %v955, %v957
        %963 = vset.pattern.permute.xlu0 11
        %964 = vperm.xlu0 %963, %v454
        %v965 = vpop.permute.xlu0 %964
        %v967 = vmul.f32 %v962, %v965
        %v968 = vmul.f32 %v961, %v965
        %v969 = vadd.f32 %v952, %v967
        %v970 = vadd.f32 %v953, %v968
        %971 = vrot.lane.b32.xlu0 %v377, 79
        %v972 = vpop.permute.xlu0 %971
        %973 = vrot.lane.b32.xlu0 %v378, 79
        %v974 = vpop.permute.xlu0 %973
        %975 = vrot.lane.b32.xlu0 %v379, 79
        %v976 = vpop.permute.xlu0 %975
        %vm977 = vcmp.lt.s32.totalorder %v381, 79
        %v978 = vsel %vm977, %v974, %v976
        %v979 = vsel %vm977, %v972, %v974
        %980 = vset.pattern.permute.xlu0 18
        %981 = vperm.xlu0 %980, %v454
        %v982 = vpop.permute.xlu0 %981
        %v984 = vmul.f32 %v979, %v982
        %v985 = vmul.f32 %v978, %v982
        %v986 = vadd.f32 %v969, %v984
        %v987 = vadd.f32 %v970, %v985
        %988 = vrot.lane.b32.xlu0 %v377, 63
        %v989 = vpop.permute.xlu0 %988
        %990 = vrot.lane.b32.xlu0 %v378, 63
        %v991 = vpop.permute.xlu0 %990
        %992 = vrot.lane.b32.xlu0 %v379, 63
        %v993 = vpop.permute.xlu0 %992
        %vm994 = vcmp.lt.s32.totalorder %v381, 63
        %v995 = vsel %vm994, %v991, %v993
        %v996 = vsel %vm994, %v989, %v991
        %997 = vset.pattern.permute.xlu0 25
        %998 = vperm.xlu0 %997, %v454
        %v999 = vpop.permute.xlu0 %998
        %v1001 = vmul.f32 %v996, %v999
        %v1002 = vmul.f32 %v995, %v999
        %v1003 = vadd.f32 %v986, %v1001
        %v1004 = vadd.f32 %v987, %v1002
        %1005 = vrot.lane.b32.xlu0 %v377, 47
        %v1006 = vpop.permute.xlu0 %1005
        %1007 = vrot.lane.b32.xlu0 %v378, 47
        %v1008 = vpop.permute.xlu0 %1007
        %1009 = vrot.lane.b32.xlu0 %v379, 47
        %v1010 = vpop.permute.xlu0 %1009
        %vm1011 = vcmp.lt.s32.totalorder %v381, 47
        %v1012 = vsel %vm1011, %v1008, %v1010
        %v1013 = vsel %vm1011, %v1006, %v1008
        %1014 = vset.pattern.permute.xlu0 32
        %1015 = vperm.xlu0 %1014, %v454
        %v1016 = vpop.permute.xlu0 %1015
        %v1018 = vmul.f32 %v1013, %v1016
        %v1019 = vmul.f32 %v1012, %v1016
        %v1020 = vadd.f32 %v1003, %v1018
        %v1021 = vadd.f32 %v1004, %v1019
        %1022 = vrot.lane.b32.xlu0 %v377, 31
        %v1023 = vpop.permute.xlu0 %1022
        %1024 = vrot.lane.b32.xlu0 %v378, 31
        %v1025 = vpop.permute.xlu0 %1024
        %1026 = vrot.lane.b32.xlu0 %v379, 31
        %v1027 = vpop.permute.xlu0 %1026
        %vm1028 = vcmp.lt.s32.totalorder %v381, 31
        %v1029 = vsel %vm1028, %v1025, %v1027
        %v1030 = vsel %vm1028, %v1023, %v1025
        %1031 = vset.pattern.permute.xlu0 39
        %1032 = vperm.xlu0 %1031, %v454
        %v1033 = vpop.permute.xlu0 %1032
        %v1035 = vmul.f32 %v1030, %v1033
        %v1036 = vmul.f32 %v1029, %v1033
        %v1037 = vadd.f32 %v1020, %v1035
        %v1038 = vadd.f32 %v1021, %v1036
        %1039 = vrot.lane.b32.xlu0 %v377, 15
        %v1040 = vpop.permute.xlu0 %1039
        %1041 = vrot.lane.b32.xlu0 %v378, 15
        %v1042 = vpop.permute.xlu0 %1041
        %1043 = vrot.lane.b32.xlu0 %v379, 15
        %v1044 = vpop.permute.xlu0 %1043
        %vm1045 = vcmp.lt.s32.totalorder %v381, 15
        %v1046 = vsel %vm1045, %v1042, %v1044
        %v1047 = vsel %vm1045, %v1040, %v1042
        %1048 = vset.pattern.permute.xlu0 46
        %1049 = vperm.xlu0 %1048, %v454
        %v1050 = vpop.permute.xlu0 %1049
        %v1052 = vmul.f32 %v1047, %v1050
        %v1053 = vmul.f32 %v1046, %v1050
        %v1054 = vadd.f32 %v1037, %v1052
        %v1055 = vadd.f32 %v1038, %v1053
        %v1056 = vmul.f32 %v1054, %v423
        %v1057 = vmul.f32 %v1055, %v424
        %v1058 = vadd.f32 %v935, %v1056
        %v1059 = vadd.f32 %v936, %v1057
        %1060 = vrot.lane.b32.xlu0 %v377, 110
        %v1061 = vpop.permute.xlu0 %1060
        %1062 = vrot.lane.b32.xlu0 %v378, 110
        %v1063 = vpop.permute.xlu0 %1062
        %1064 = vrot.lane.b32.xlu0 %v379, 110
        %v1065 = vpop.permute.xlu0 %1064
        %vm1066 = vcmp.lt.s32.totalorder %v381, 110
        %v1067 = vsel %vm1066, %v1063, %v1065
        %v1068 = vsel %vm1066, %v1061, %v1063
        %1069 = vset.pattern.permute.xlu0 5
        %1070 = vperm.xlu0 %1069, %v454
        %v1071 = vpop.permute.xlu0 %1070
        %v1073 = vmul.f32 %v1068, %v1071
        %v1074 = vmul.f32 %v1067, %v1071
        %v1075 = vadd.f32 %v1073, 0.0
        %v1076 = vadd.f32 %v1074, 0.0
        %1077 = vrot.lane.b32.xlu0 %v377, 94
        %v1078 = vpop.permute.xlu0 %1077
        %1079 = vrot.lane.b32.xlu0 %v378, 94
        %v1080 = vpop.permute.xlu0 %1079
        %1081 = vrot.lane.b32.xlu0 %v379, 94
        %v1082 = vpop.permute.xlu0 %1081
        %vm1083 = vcmp.lt.s32.totalorder %v381, 94
        %v1084 = vsel %vm1083, %v1080, %v1082
        %v1085 = vsel %vm1083, %v1078, %v1080
        %1086 = vset.pattern.permute.xlu0 12
        %1087 = vperm.xlu0 %1086, %v454
        %v1088 = vpop.permute.xlu0 %1087
        %v1090 = vmul.f32 %v1085, %v1088
        %v1091 = vmul.f32 %v1084, %v1088
        %v1092 = vadd.f32 %v1075, %v1090
        %v1093 = vadd.f32 %v1076, %v1091
        %1094 = vrot.lane.b32.xlu0 %v377, 78
        %v1095 = vpop.permute.xlu0 %1094
        %1096 = vrot.lane.b32.xlu0 %v378, 78
        %v1097 = vpop.permute.xlu0 %1096
        %1098 = vrot.lane.b32.xlu0 %v379, 78
        %v1099 = vpop.permute.xlu0 %1098
        %vm1100 = vcmp.lt.s32.totalorder %v381, 78
        %v1101 = vsel %vm1100, %v1097, %v1099
        %v1102 = vsel %vm1100, %v1095, %v1097
        %1103 = vset.pattern.permute.xlu0 19
        %1104 = vperm.xlu0 %1103, %v454
        %v1105 = vpop.permute.xlu0 %1104
        %v1107 = vmul.f32 %v1102, %v1105
        %v1108 = vmul.f32 %v1101, %v1105
        %v1109 = vadd.f32 %v1092, %v1107
        %v1110 = vadd.f32 %v1093, %v1108
        %1111 = vrot.lane.b32.xlu0 %v377, 62
        %v1112 = vpop.permute.xlu0 %1111
        %1113 = vrot.lane.b32.xlu0 %v378, 62
        %v1114 = vpop.permute.xlu0 %1113
        %1115 = vrot.lane.b32.xlu0 %v379, 62
        %v1116 = vpop.permute.xlu0 %1115
        %vm1117 = vcmp.lt.s32.totalorder %v381, 62
        %v1118 = vsel %vm1117, %v1114, %v1116
        %v1119 = vsel %vm1117, %v1112, %v1114
        %1120 = vset.pattern.permute.xlu0 26
        %1121 = vperm.xlu0 %1120, %v454
        %v1122 = vpop.permute.xlu0 %1121
        %v1124 = vmul.f32 %v1119, %v1122
        %v1125 = vmul.f32 %v1118, %v1122
        %v1126 = vadd.f32 %v1109, %v1124
        %v1127 = vadd.f32 %v1110, %v1125
        %1128 = vrot.lane.b32.xlu0 %v377, 46
        %v1129 = vpop.permute.xlu0 %1128
        %1130 = vrot.lane.b32.xlu0 %v378, 46
        %v1131 = vpop.permute.xlu0 %1130
        %1132 = vrot.lane.b32.xlu0 %v379, 46
        %v1133 = vpop.permute.xlu0 %1132
        %vm1134 = vcmp.lt.s32.totalorder %v381, 46
        %v1135 = vsel %vm1134, %v1131, %v1133
        %v1136 = vsel %vm1134, %v1129, %v1131
        %1137 = vset.pattern.permute.xlu0 33
        %1138 = vperm.xlu0 %1137, %v454
        %v1139 = vpop.permute.xlu0 %1138
        %v1141 = vmul.f32 %v1136, %v1139
        %v1142 = vmul.f32 %v1135, %v1139
        %v1143 = vadd.f32 %v1126, %v1141
        %v1144 = vadd.f32 %v1127, %v1142
        %1145 = vrot.lane.b32.xlu0 %v377, 30
        %v1146 = vpop.permute.xlu0 %1145
        %1147 = vrot.lane.b32.xlu0 %v378, 30
        %v1148 = vpop.permute.xlu0 %1147
        %1149 = vrot.lane.b32.xlu0 %v379, 30
        %v1150 = vpop.permute.xlu0 %1149
        %vm1151 = vcmp.lt.s32.totalorder %v381, 30
        %v1152 = vsel %vm1151, %v1148, %v1150
        %v1153 = vsel %vm1151, %v1146, %v1148
        %1154 = vset.pattern.permute.xlu0 40
        %1155 = vperm.xlu0 %1154, %v454
        %v1156 = vpop.permute.xlu0 %1155
        %v1158 = vmul.f32 %v1153, %v1156
        %v1159 = vmul.f32 %v1152, %v1156
        %v1160 = vadd.f32 %v1143, %v1158
        %v1161 = vadd.f32 %v1144, %v1159
        %1162 = vrot.lane.b32.xlu0 %v377, 14
        %v1163 = vpop.permute.xlu0 %1162
        %1164 = vrot.lane.b32.xlu0 %v378, 14
        %v1165 = vpop.permute.xlu0 %1164
        %1166 = vrot.lane.b32.xlu0 %v379, 14
        %v1167 = vpop.permute.xlu0 %1166
        %vm1168 = vcmp.lt.s32.totalorder %v381, 14
        %v1169 = vsel %vm1168, %v1165, %v1167
        %v1170 = vsel %vm1168, %v1163, %v1165
        %1171 = vset.pattern.permute.xlu0 47
        %1172 = vperm.xlu0 %1171, %v454
        %v1173 = vpop.permute.xlu0 %1172
        %v1175 = vmul.f32 %v1170, %v1173
        %v1176 = vmul.f32 %v1169, %v1173
        %v1177 = vadd.f32 %v1160, %v1175
        %v1178 = vadd.f32 %v1161, %v1176
        %v1179 = vmul.f32 %v1177, %v433
        %v1180 = vmul.f32 %v1178, %v434
        %v1181 = vadd.f32 %v1058, %v1179
        %v1182 = vadd.f32 %v1059, %v1180
        %1183 = vrot.lane.b32.xlu0 %v377, 109
        %v1184 = vpop.permute.xlu0 %1183
        %1185 = vrot.lane.b32.xlu0 %v378, 109
        %v1186 = vpop.permute.xlu0 %1185
        %1187 = vrot.lane.b32.xlu0 %v379, 109
        %v1188 = vpop.permute.xlu0 %1187
        %vm1189 = vcmp.lt.s32.totalorder %v381, 109
        %v1190 = vsel %vm1189, %v1186, %v1188
        %v1191 = vsel %vm1189, %v1184, %v1186
        %1192 = vset.pattern.permute.xlu0 6
        %1193 = vperm.xlu0 %1192, %v454
        %v1194 = vpop.permute.xlu0 %1193
        %v1196 = vmul.f32 %v1191, %v1194
        %v1197 = vmul.f32 %v1190, %v1194
        %v1198 = vadd.f32 %v1196, 0.0
        %v1199 = vadd.f32 %v1197, 0.0
        %1200 = vrot.lane.b32.xlu0 %v377, 93
        %v1201 = vpop.permute.xlu0 %1200
        %1202 = vrot.lane.b32.xlu0 %v378, 93
        %v1203 = vpop.permute.xlu0 %1202
        %1204 = vrot.lane.b32.xlu0 %v379, 93
        %v1205 = vpop.permute.xlu0 %1204
        %vm1206 = vcmp.lt.s32.totalorder %v381, 93
        %v1207 = vsel %vm1206, %v1203, %v1205
        %v1208 = vsel %vm1206, %v1201, %v1203
        %1209 = vset.pattern.permute.xlu0 13
        %1210 = vperm.xlu0 %1209, %v454
        %v1211 = vpop.permute.xlu0 %1210
        %v1213 = vmul.f32 %v1208, %v1211
        %v1214 = vmul.f32 %v1207, %v1211
        %v1215 = vadd.f32 %v1198, %v1213
        %v1216 = vadd.f32 %v1199, %v1214
        %1217 = vrot.lane.b32.xlu0 %v377, 77
        %v1218 = vpop.permute.xlu0 %1217
        %1219 = vrot.lane.b32.xlu0 %v378, 77
        %v1220 = vpop.permute.xlu0 %1219
        %1221 = vrot.lane.b32.xlu0 %v379, 77
        %v1222 = vpop.permute.xlu0 %1221
        %vm1223 = vcmp.lt.s32.totalorder %v381, 77
        %v1224 = vsel %vm1223, %v1220, %v1222
        %v1225 = vsel %vm1223, %v1218, %v1220
        %1226 = vset.pattern.permute.xlu0 20
        %1227 = vperm.xlu0 %1226, %v454
        %v1228 = vpop.permute.xlu0 %1227
        %v1230 = vmul.f32 %v1225, %v1228
        %v1231 = vmul.f32 %v1224, %v1228
        %v1232 = vadd.f32 %v1215, %v1230
        %v1233 = vadd.f32 %v1216, %v1231
        %1234 = vrot.lane.b32.xlu0 %v377, 61
        %v1235 = vpop.permute.xlu0 %1234
        %1236 = vrot.lane.b32.xlu0 %v378, 61
        %v1237 = vpop.permute.xlu0 %1236
        %1238 = vrot.lane.b32.xlu0 %v379, 61
        %v1239 = vpop.permute.xlu0 %1238
        %vm1240 = vcmp.lt.s32.totalorder %v381, 61
        %v1241 = vsel %vm1240, %v1237, %v1239
        %v1242 = vsel %vm1240, %v1235, %v1237
        %1243 = vset.pattern.permute.xlu0 27
        %1244 = vperm.xlu0 %1243, %v454
        %v1245 = vpop.permute.xlu0 %1244
        %v1247 = vmul.f32 %v1242, %v1245
        %v1248 = vmul.f32 %v1241, %v1245
        %v1249 = vadd.f32 %v1232, %v1247
        %v1250 = vadd.f32 %v1233, %v1248
        %1251 = vrot.lane.b32.xlu0 %v377, 45
        %v1252 = vpop.permute.xlu0 %1251
        %1253 = vrot.lane.b32.xlu0 %v378, 45
        %v1254 = vpop.permute.xlu0 %1253
        %1255 = vrot.lane.b32.xlu0 %v379, 45
        %v1256 = vpop.permute.xlu0 %1255
        %vm1257 = vcmp.lt.s32.totalorder %v381, 45
        %v1258 = vsel %vm1257, %v1254, %v1256
        %v1259 = vsel %vm1257, %v1252, %v1254
        %1260 = vset.pattern.permute.xlu0 34
        %1261 = vperm.xlu0 %1260, %v454
        %v1262 = vpop.permute.xlu0 %1261
        %v1264 = vmul.f32 %v1259, %v1262
        %v1265 = vmul.f32 %v1258, %v1262
        %v1266 = vadd.f32 %v1249, %v1264
        %v1267 = vadd.f32 %v1250, %v1265
        %1268 = vrot.lane.b32.xlu0 %v377, 29
        %v1269 = vpop.permute.xlu0 %1268
        %1270 = vrot.lane.b32.xlu0 %v378, 29
        %v1271 = vpop.permute.xlu0 %1270
        %1272 = vrot.lane.b32.xlu0 %v379, 29
        %v1273 = vpop.permute.xlu0 %1272
        %vm1274 = vcmp.lt.s32.totalorder %v381, 29
        %v1275 = vsel %vm1274, %v1271, %v1273
        %v1276 = vsel %vm1274, %v1269, %v1271
        %1277 = vset.pattern.permute.xlu0 41
        %1278 = vperm.xlu0 %1277, %v454
        %v1279 = vpop.permute.xlu0 %1278
        %v1281 = vmul.f32 %v1276, %v1279
        %v1282 = vmul.f32 %v1275, %v1279
        %v1283 = vadd.f32 %v1266, %v1281
        %v1284 = vadd.f32 %v1267, %v1282
        %1285 = vrot.lane.b32.xlu0 %v377, 13
        %v1286 = vpop.permute.xlu0 %1285
        %1287 = vrot.lane.b32.xlu0 %v378, 13
        %v1288 = vpop.permute.xlu0 %1287
        %1289 = vrot.lane.b32.xlu0 %v379, 13
        %v1290 = vpop.permute.xlu0 %1289
        %vm1291 = vcmp.lt.s32.totalorder %v381, 13
        %v1292 = vsel %vm1291, %v1288, %v1290
        %v1293 = vsel %vm1291, %v1286, %v1288
        %1294 = vset.pattern.permute.xlu0 48
        %1295 = vperm.xlu0 %1294, %v454
        %v1296 = vpop.permute.xlu0 %1295
        %v1298 = vmul.f32 %v1293, %v1296
        %v1299 = vmul.f32 %v1292, %v1296
        %v1300 = vadd.f32 %v1283, %v1298
        %v1301 = vadd.f32 %v1284, %v1299
        %v1302 = vmul.f32 %v1300, %v443
        %v1303 = vmul.f32 %v1301, %v444
        %v1304 = vadd.f32 %v1181, %v1302
        %v1305 = vadd.f32 %v1182, %v1303
        %v1306 = vld [vmem:[%s2] sm:$0xff]
        %1308 = vset.pattern.permute.xlu0 0
        %1309 = vperm.xlu0 %1308, %v1306
        %v1310 = vpop.permute.xlu0 %1309
        %v1312 = vadd.f32 %v1304, %v1310
        %v1313 = vadd.f32 %v1305, %v1310
        %v1314 = vadd.f32 %v1312, %v1313
        %1315 = vadd.xlane.f32.xlu0 %v1314
        %v1316 = vpop.xlane.xlu0 %1315
        %v1317 = vrot.slane %v1316, 4
        %v1318 = vadd.f32 %v1316, %v1317
        %v1319 = vrot.slane %v1318, 2
        %v1320 = vadd.f32 %v1318, %v1319
        %v1321 = vrot.slane %v1320, 1
        %v1322 = vadd.f32 %v1320, %v1321
        %s1323 = vtos %v1322
        %v1324 = vstv %s1323
        %v1325 = vmul.f32 %v1312, %v1312
        %v1326 = vmul.f32 %v1313, %v1313
        %v1327 = vadd.f32 %v1325, %v1326
        %1328 = vadd.xlane.f32.xlu0 %v1327
        %v1329 = vpop.xlane.xlu0 %1328
        %v1330 = vrot.slane %v1329, 4
        %v1331 = vadd.f32 %v1329, %v1330
        %v1332 = vrot.slane %v1331, 2
        %v1333 = vadd.f32 %v1331, %v1332
        %v1334 = vrot.slane %v1333, 1
        %v1335 = vadd.f32 %v1333, %v1334
        %s1336 = vtos %v1335
        %v1337 = vstv %s1336
        %v1338 = vrcp.pop 2048.0
        %v1339 = vmul.f32 %v1324, %v1338
        %v1340 = vmul.f32 %v1337, %v1338
        %v1341 = vmul.f32 %v1339, %v1339
        %v1342 = vsub.f32 %v1340, %v1341
        %v1343 = vadd.f32 %v1342, 1e-05
        %v1344 = vrsqrt.pop %v1343
        %v1345 = vld [vmem:[%s3] sm:$0xff]
        %v1346 = vmul.f32 %v1344, %v1345
        %v1347 = vld [vmem:[%s4] sm:$0xff]
        %v1348 = vmul.f32 %v1339, %v1346
        %v1349 = vsub.f32 %v1347, %v1348
        %1351 = vset.pattern.permute.xlu0 0
        %1352 = vperm.xlu0 %1351, %v1346
        %v1353 = vpop.permute.xlu0 %1352
        %v1355 = vmul.f32 %v1312, %v1353
        %v1356 = vmul.f32 %v1313, %v1353
        %1358 = vset.pattern.permute.xlu0 0
        %1359 = vperm.xlu0 %1358, %v1349
        %v1360 = vpop.permute.xlu0 %1359
        %v1362 = vadd.f32 %v1355, %v1360
        %v1363 = vadd.f32 %v1356, %v1360
        %v1364 = vld [vmem:[%s5] sm:$0xff]
        %v1365 = vld [vmem:[%s5 + $0x8] sm:$0xff]
        %v1366 = vld [vmem:[%s5 + $0x10] sm:$0xff]
        %v1367 = vld [vmem:[%s5 + $0x18] sm:$0xff]
        %v1368 = vld [vmem:[%s6] sm:$0xff]
        %v1369 = vld [vmem:[%s6 + $0x8] sm:$0xff]
        %v1370 = vld [vmem:[%s6 + $0x10] sm:$0xff]
        %v1371 = vld [vmem:[%s6 + $0x18] sm:$0xff]
        %1373 = vset.pattern.permute.xlu0 0
        %1374 = vperm.xlu0 %1373, %v1368
        %v1375 = vpop.permute.xlu0 %1374
        %1378 = vset.pattern.permute.xlu0 0
        %1379 = vperm.xlu0 %1378, %v1369
        %v1380 = vpop.permute.xlu0 %1379
        %1383 = vset.pattern.permute.xlu0 0
        %1384 = vperm.xlu0 %1383, %v1370
        %v1385 = vpop.permute.xlu0 %1384
        %1388 = vset.pattern.permute.xlu0 0
        %1389 = vperm.xlu0 %1388, %v1371
        %v1390 = vpop.permute.xlu0 %1389
        %vm1392 = vcmask 64512
        %v1394 = vsel %vm1392, %v1364, 0
        %v1397 = vsel %vm1392, %v1365, 0
        %v1400 = vsel %vm1392, %v1366, 0
        %v1403 = vsel %vm1392, %v1367, 0
        %1405 = vmatprep.subr.mxu0 0.0
        %1406 = vmatpush1.msra.mxu0 0.0
        %1407 = vmatprep.subr.mxu0 0.0
        %1408 = vmatpush1.msra.mxu0 0.0
        %1409 = vmatprep.subr.mxu0 0.0
        %1410 = vmatpush1.msra.mxu0 0.0
        %1411 = vmatprep.subr.mxu0 0.0
        %1412 = vmatpush1.msra.mxu0 0.0
        %1413 = vmatprep.subr.mxu0 0.0
        %1414 = vmatpush1.msra.mxu0 0.0
        %1415 = vmatprep.subr.mxu0 0.0
        %1416 = vmatpush1.msra.mxu0 0.0
        %1417 = vmatprep.subr.mxu0 0.0
        %1418 = vmatpush1.msra.mxu0 0.0
        %1419 = vmatprep.subr.mxu0 0.0
        %1420 = vmatpush1.msra.mxu0 0.0
        %1421 = vmatprep.subr.mxu0 0.0
        %1422 = vmatpush1.msra.mxu0 0.0
        %1423 = vmatprep.subr.mxu0 0.0
        %1424 = vmatpush1.msra.mxu0 0.0
        %1425 = vmatprep.subr.mxu0 0.0
        %1426 = vmatpush1.msra.mxu0 0.0
        %1427 = vmatprep.subr.mxu0 0.0
        %1428 = vmatpush1.msra.mxu0 0.0
        %1429 = vmatprep.subr.mxu0 0.0
        %1430 = vmatpush1.msra.mxu0 0.0
        %1431 = vmatprep.subr.mxu0 0.0
        %1432 = vmatpush1.msra.mxu0 0.0
        %1433 = vmatprep.subr.mxu0 0.0
        %1434 = vmatpush1.msra.mxu0 0.0
        %1435 = vmatprep.subr.mxu0 %v1363
        %1436 = vmatpush1.msra.mxu0 %v1362
        %1437 = vmatprep.subr.mxu0 0.0
        %1438 = vmatpush2.msra.mxu0 0.0
        %1439 = vmatprep.subr.mxu0 0.0
        %1440 = vmatpush2.msra.mxu0 0.0
        %1441 = vmatprep.subr.mxu0 0.0
        %1442 = vmatpush2.msra.mxu0 0.0
        %1443 = vmatprep.subr.mxu0 0.0
        %1444 = vmatpush2.msra.mxu0 0.0
        %1445 = vmatprep.subr.mxu0 0.0
        %1446 = vmatpush2.msra.mxu0 0.0
        %1447 = vmatprep.subr.mxu0 0.0
        %1448 = vmatpush2.msra.mxu0 0.0
        %1449 = vmatprep.subr.mxu0 0.0
        %1450 = vmatpush2.msra.mxu0 0.0
        %1451 = vmatprep.subr.mxu0 0.0
        %1452 = vmatpush2.msra.mxu0 0.0
        %1453 = vmatprep.subr.mxu0 0.0
        %1454 = vmatpush2.msra.mxu0 0.0
        %1455 = vmatprep.subr.mxu0 0.0
        %1456 = vmatpush2.msra.mxu0 0.0
        %1457 = vmatprep.subr.mxu0 0.0
        %1458 = vmatpush2.msra.mxu0 0.0
        %1459 = vmatprep.subr.mxu0 0.0
        %1460 = vmatpush2.msra.mxu0 0.0
        %1461 = vmatprep.subr.mxu0 0.0
        %1462 = vmatpush2.msra.mxu0 0.0
        %1463 = vmatprep.subr.mxu0 0.0
        %1464 = vmatpush2.msra.mxu0 0.0
        %1465 = vmatprep.subr.mxu0 0.0
        %1466 = vmatpush2.msra.mxu0 0.0
        %1467 = vmatprep.subr.mxu0 0.0
        %1468 = vmatpush2.msra.mxu0 0.0
        %1469 = vmatprep.mubr.f32.mxu0 0.0
        %1470 = vmatmul.mubr.f32.gmra.mxu0 %v1394
        %v1471 = vpop.f32.mrf.mxu0
        %v1472 = vadd.f32 %v1375, %v1471
        %v1473 = vpop.f32.mrf.mxu0
        %v1474 = vadd.f32 %v1375, %v1473
        %1475 = vmatprep.mubr.f32.mxu0 0.0
        %1476 = vmatmul.mubr.f32.gmra.mxu0 %v1397
        %v1477 = vpop.f32.mrf.mxu0
        %v1478 = vadd.f32 %v1380, %v1477
        %v1479 = vpop.f32.mrf.mxu0
        %v1480 = vadd.f32 %v1380, %v1479
        %1481 = vmatprep.mubr.f32.mxu0 0.0
        %1482 = vmatmul.mubr.f32.gmra.mxu0 %v1400
        %v1483 = vpop.f32.mrf.mxu0
        %v1484 = vadd.f32 %v1385, %v1483
        %v1485 = vpop.f32.mrf.mxu0
        %v1486 = vadd.f32 %v1385, %v1485
        %1487 = vmatprep.mubr.f32.mxu0 0.0
        %1488 = vmatmul.mubr.f32.gmra.mxu0 %v1403
        %v1489 = vpop.f32.mrf.mxu0
        %v1490 = vadd.f32 %v1390, %v1489
        %v1491 = vpop.f32.mrf.mxu0
        %v1492 = vadd.f32 %v1390, %v1491
        %1493 = vdwg.mxu0
        %v1494 = vmul.f32 %v1472, 0.70710677
        %v1495 = vmul.f32 %v1474, 0.70710677
        %v1496 = vmul.f32 %v1478, 0.70710677
        %v1497 = vmul.f32 %v1480, 0.70710677
        %v1498 = vmul.f32 %v1484, 0.70710677
        %v1499 = vmul.f32 %v1486, 0.70710677
        %v1500 = vmul.f32 %v1490, 0.70710677
        %v1501 = vmul.f32 %v1492, 0.70710677
        %vm1502 = vcmp.ge.f32.partialorder %v1494, 0.0
        %vm1503 = vcmp.ge.f32.partialorder %v1495, 0.0
        %vm1504 = vcmp.ge.f32.partialorder %v1496, 0.0
        %vm1505 = vcmp.ge.f32.partialorder %v1497, 0.0
        %vm1506 = vcmp.ge.f32.partialorder %v1498, 0.0
        %vm1507 = vcmp.ge.f32.partialorder %v1499, 0.0
        %vm1508 = vcmp.ge.f32.partialorder %v1500, 0.0
        %vm1509 = vcmp.ge.f32.partialorder %v1501, 0.0
        %v1510 = vsel %vm1502, 1.0, -1.0
        %v1511 = vsel %vm1503, 1.0, -1.0
        %v1512 = vsel %vm1504, 1.0, -1.0
        %v1513 = vsel %vm1505, 1.0, -1.0
        %v1514 = vsel %vm1506, 1.0, -1.0
        %v1515 = vsel %vm1507, 1.0, -1.0
        %v1516 = vsel %vm1508, 1.0, -1.0
        %v1517 = vsel %vm1509, 1.0, -1.0
        %v1518 = vand.u32 2147483647, %v1494
        %v1519 = vand.u32 2147483647, %v1495
        %v1520 = vand.u32 2147483647, %v1496
        %v1521 = vand.u32 2147483647, %v1497
        %v1522 = vand.u32 2147483647, %v1498
        %v1523 = vand.u32 2147483647, %v1499
        %v1524 = vand.u32 2147483647, %v1500
        %v1525 = vand.u32 2147483647, %v1501
        %v1526 = vmul.f32 %v1518, 0.3275911
        %v1527 = vmul.f32 %v1519, 0.3275911
        %v1528 = vmul.f32 %v1520, 0.3275911
        %v1529 = vmul.f32 %v1521, 0.3275911
        %v1530 = vmul.f32 %v1522, 0.3275911
        %v1531 = vmul.f32 %v1523, 0.3275911
        %v1532 = vmul.f32 %v1524, 0.3275911
        %v1533 = vmul.f32 %v1525, 0.3275911
        %v1534 = vadd.f32 %v1526, 1.0
        %v1535 = vadd.f32 %v1527, 1.0
        %v1536 = vadd.f32 %v1528, 1.0
        %v1537 = vadd.f32 %v1529, 1.0
        %v1538 = vadd.f32 %v1530, 1.0
        %v1539 = vadd.f32 %v1531, 1.0
        %v1540 = vadd.f32 %v1532, 1.0
        %v1541 = vadd.f32 %v1533, 1.0
        %v1542 = vrcp.pop %v1534
        %v1543 = vrcp.pop %v1535
        %v1544 = vrcp.pop %v1536
        %v1545 = vrcp.pop %v1537
        %v1546 = vrcp.pop %v1538
        %v1547 = vrcp.pop %v1539
        %v1548 = vrcp.pop %v1540
        %v1549 = vrcp.pop %v1541
        %v1550 = vmul.f32 %v1534, %v1542
        %v1551 = vmul.f32 %v1535, %v1543
        %v1552 = vmul.f32 %v1536, %v1544
        %v1553 = vmul.f32 %v1537, %v1545
        %v1554 = vmul.f32 %v1538, %v1546
        %v1555 = vmul.f32 %v1539, %v1547
        %v1556 = vmul.f32 %v1540, %v1548
        %v1557 = vmul.f32 %v1541, %v1549
        %v1558 = vsub.f32 2.0, %v1550
        %v1559 = vsub.f32 2.0, %v1551
        %v1560 = vsub.f32 2.0, %v1552
        %v1561 = vsub.f32 2.0, %v1553
        %v1562 = vsub.f32 2.0, %v1554
        %v1563 = vsub.f32 2.0, %v1555
        %v1564 = vsub.f32 2.0, %v1556
        %v1565 = vsub.f32 2.0, %v1557
        %v1566 = vmul.f32 %v1542, %v1558
        %v1567 = vmul.f32 %v1543, %v1559
        %v1568 = vmul.f32 %v1544, %v1560
        %v1569 = vmul.f32 %v1545, %v1561
        %v1570 = vmul.f32 %v1546, %v1562
        %v1571 = vmul.f32 %v1547, %v1563
        %v1572 = vmul.f32 %v1548, %v1564
        %v1573 = vmul.f32 %v1549, %v1565
        %v1574 = vmul.f32 %v1566, 1.0614054
        %v1575 = vmul.f32 %v1567, 1.0614054
        %v1576 = vmul.f32 %v1568, 1.0614054
        %v1577 = vmul.f32 %v1569, 1.0614054
        %v1578 = vmul.f32 %v1570, 1.0614054
        %v1579 = vmul.f32 %v1571, 1.0614054
        %v1580 = vmul.f32 %v1572, 1.0614054
        %v1581 = vmul.f32 %v1573, 1.0614054
        %v1582 = vadd.f32 %v1574, -1.4531521
        %v1583 = vadd.f32 %v1575, -1.4531521
        %v1584 = vadd.f32 %v1576, -1.4531521
        %v1585 = vadd.f32 %v1577, -1.4531521
        %v1586 = vadd.f32 %v1578, -1.4531521
        %v1587 = vadd.f32 %v1579, -1.4531521
        %v1588 = vadd.f32 %v1580, -1.4531521
        %v1589 = vadd.f32 %v1581, -1.4531521
        %v1590 = vmul.f32 %v1582, %v1566
        %v1591 = vmul.f32 %v1583, %v1567
        %v1592 = vmul.f32 %v1584, %v1568
        %v1593 = vmul.f32 %v1585, %v1569
        %v1594 = vmul.f32 %v1586, %v1570
        %v1595 = vmul.f32 %v1587, %v1571
        %v1596 = vmul.f32 %v1588, %v1572
        %v1597 = vmul.f32 %v1589, %v1573
        %v1598 = vadd.f32 %v1590, 1.4214138
        %v1599 = vadd.f32 %v1591, 1.4214138
        %v1600 = vadd.f32 %v1592, 1.4214138
        %v1601 = vadd.f32 %v1593, 1.4214138
        %v1602 = vadd.f32 %v1594, 1.4214138
        %v1603 = vadd.f32 %v1595, 1.4214138
        %v1604 = vadd.f32 %v1596, 1.4214138
        %v1605 = vadd.f32 %v1597, 1.4214138
        %v1606 = vmul.f32 %v1598, %v1566
        %v1607 = vmul.f32 %v1599, %v1567
        %v1608 = vmul.f32 %v1600, %v1568
        %v1609 = vmul.f32 %v1601, %v1569
        %v1610 = vmul.f32 %v1602, %v1570
        %v1611 = vmul.f32 %v1603, %v1571
        %v1612 = vmul.f32 %v1604, %v1572
        %v1613 = vmul.f32 %v1605, %v1573
        %v1614 = vadd.f32 %v1606, -0.28449672
        %v1615 = vadd.f32 %v1607, -0.28449672
        %v1616 = vadd.f32 %v1608, -0.28449672
        %v1617 = vadd.f32 %v1609, -0.28449672
        %v1618 = vadd.f32 %v1610, -0.28449672
        %v1619 = vadd.f32 %v1611, -0.28449672
        %v1620 = vadd.f32 %v1612, -0.28449672
        %v1621 = vadd.f32 %v1613, -0.28449672
        %v1622 = vmul.f32 %v1614, %v1566
        %v1623 = vmul.f32 %v1615, %v1567
        %v1624 = vmul.f32 %v1616, %v1568
        %v1625 = vmul.f32 %v1617, %v1569
        %v1626 = vmul.f32 %v1618, %v1570
        %v1627 = vmul.f32 %v1619, %v1571
        %v1628 = vmul.f32 %v1620, %v1572
        %v1629 = vmul.f32 %v1621, %v1573
        %v1630 = vadd.f32 %v1622, 0.2548296
        %v1631 = vadd.f32 %v1623, 0.2548296
        %v1632 = vadd.f32 %v1624, 0.2548296
        %v1633 = vadd.f32 %v1625, 0.2548296
        %v1634 = vadd.f32 %v1626, 0.2548296
        %v1635 = vadd.f32 %v1627, 0.2548296
        %v1636 = vadd.f32 %v1628, 0.2548296
        %v1637 = vadd.f32 %v1629, 0.2548296
        %v1638 = vmul.f32 %v1630, %v1566
        %v1639 = vmul.f32 %v1631, %v1567
        %v1640 = vmul.f32 %v1632, %v1568
        %v1641 = vmul.f32 %v1633, %v1569
        %v1642 = vmul.f32 %v1634, %v1570
        %v1643 = vmul.f32 %v1635, %v1571
        %v1644 = vmul.f32 %v1636, %v1572
        %v1645 = vmul.f32 %v1637, %v1573
        %v1646 = vsub.f32 0.0, %v1518
        %v1647 = vsub.f32 0.0, %v1519
        %v1648 = vsub.f32 0.0, %v1520
        %v1649 = vsub.f32 0.0, %v1521
        %v1650 = vsub.f32 0.0, %v1522
        %v1651 = vsub.f32 0.0, %v1523
        %v1652 = vsub.f32 0.0, %v1524
        %v1653 = vsub.f32 0.0, %v1525
        %v1654 = vmul.f32 %v1646, %v1518
        %v1655 = vmul.f32 %v1647, %v1519
        %v1656 = vmul.f32 %v1648, %v1520
        %v1657 = vmul.f32 %v1649, %v1521
        %v1658 = vmul.f32 %v1650, %v1522
        %v1659 = vmul.f32 %v1651, %v1523
        %v1660 = vmul.f32 %v1652, %v1524
        %v1661 = vmul.f32 %v1653, %v1525
        %v1662 = vmul.f32 %v1654, 1.442695
        %v1663 = vpow.pop %v1662
        %v1664 = vmul.f32 %v1655, 1.442695
        %v1665 = vpow.pop %v1664
        %v1666 = vmul.f32 %v1656, 1.442695
        %v1667 = vpow.pop %v1666
        %v1668 = vmul.f32 %v1657, 1.442695
        %v1669 = vpow.pop %v1668
        %v1670 = vmul.f32 %v1658, 1.442695
        %v1671 = vpow.pop %v1670
        %v1672 = vmul.f32 %v1659, 1.442695
        %v1673 = vpow.pop %v1672
        %v1674 = vmul.f32 %v1660, 1.442695
        %v1675 = vpow.pop %v1674
        %v1676 = vmul.f32 %v1661, 1.442695
        %v1677 = vpow.pop %v1676
        %v1678 = vmul.f32 %v1638, %v1663
        %v1679 = vmul.f32 %v1639, %v1665
        %v1680 = vmul.f32 %v1640, %v1667
        %v1681 = vmul.f32 %v1641, %v1669
        %v1682 = vmul.f32 %v1642, %v1671
        %v1683 = vmul.f32 %v1643, %v1673
        %v1684 = vmul.f32 %v1644, %v1675
        %v1685 = vmul.f32 %v1645, %v1677
        %v1686 = vsub.f32 1.0, %v1678
        %v1687 = vsub.f32 1.0, %v1679
        %v1688 = vsub.f32 1.0, %v1680
        %v1689 = vsub.f32 1.0, %v1681
        %v1690 = vsub.f32 1.0, %v1682
        %v1691 = vsub.f32 1.0, %v1683
        %v1692 = vsub.f32 1.0, %v1684
        %v1693 = vsub.f32 1.0, %v1685
        %v1694 = vmul.f32 %v1510, %v1686
        %v1695 = vmul.f32 %v1511, %v1687
        %v1696 = vmul.f32 %v1512, %v1688
        %v1697 = vmul.f32 %v1513, %v1689
        %v1698 = vmul.f32 %v1514, %v1690
        %v1699 = vmul.f32 %v1515, %v1691
        %v1700 = vmul.f32 %v1516, %v1692
        %v1701 = vmul.f32 %v1517, %v1693
        %v1702 = vmul.f32 %v1472, 0.5
        %v1703 = vmul.f32 %v1474, 0.5
        %v1704 = vmul.f32 %v1478, 0.5
        %v1705 = vmul.f32 %v1480, 0.5
        %v1706 = vmul.f32 %v1484, 0.5
        %v1707 = vmul.f32 %v1486, 0.5
        %v1708 = vmul.f32 %v1490, 0.5
        %v1709 = vmul.f32 %v1492, 0.5
        %v1710 = vadd.f32 %v1694, 1.0
        %v1711 = vadd.f32 %v1695, 1.0
        %v1712 = vadd.f32 %v1696, 1.0
        %v1713 = vadd.f32 %v1697, 1.0
        %v1714 = vadd.f32 %v1698, 1.0
        %v1715 = vadd.f32 %v1699, 1.0
        %v1716 = vadd.f32 %v1700, 1.0
        %v1717 = vadd.f32 %v1701, 1.0
        %v1718 = vmul.f32 %v1702, %v1710
        %v1719 = vmul.f32 %v1703, %v1711
        %v1720 = vmul.f32 %v1704, %v1712
        %v1721 = vmul.f32 %v1705, %v1713
        %v1722 = vmul.f32 %v1706, %v1714
        %v1723 = vmul.f32 %v1707, %v1715
        %v1724 = vmul.f32 %v1708, %v1716
        %v1725 = vmul.f32 %v1709, %v1717
        %v1726 = vld [vmem:[%s7] sm:$0xff]
        %v1727 = vld [vmem:[%s8] sm:$0xff]
        %1729 = vset.pattern.permute.xlu0 0
        %1730 = vperm.xlu0 %1729, %v1727
        %v1731 = vpop.permute.xlu0 %1730
        %vm1733 = vcmask 261120
        %v1735 = vsel %vm1733, %v1726, 0
        %1737 = vmatprep.subr.mxu0 0.0
        %1738 = vmatpush1.msra.mxu0 0.0
        %1739 = vmatprep.subr.mxu0 0.0
        %1740 = vmatpush1.msra.mxu0 0.0
        %1741 = vmatprep.subr.mxu0 0.0
        %1742 = vmatpush1.msra.mxu0 0.0
        %1743 = vmatprep.subr.mxu0 0.0
        %1744 = vmatpush1.msra.mxu0 0.0
        %1745 = vmatprep.subr.mxu0 0.0
        %1746 = vmatpush1.msra.mxu0 0.0
        %1747 = vmatprep.subr.mxu0 0.0
        %1748 = vmatpush1.msra.mxu0 0.0
        %1749 = vmatprep.subr.mxu0 0.0
        %1750 = vmatpush1.msra.mxu0 0.0
        %1751 = vmatprep.subr.mxu0 0.0
        %1752 = vmatpush1.msra.mxu0 0.0
        %1753 = vmatprep.subr.mxu0 0.0
        %1754 = vmatpush1.msra.mxu0 0.0
        %1755 = vmatprep.subr.mxu0 0.0
        %1756 = vmatpush1.msra.mxu0 0.0
        %1757 = vmatprep.subr.mxu0 0.0
        %1758 = vmatpush1.msra.mxu0 0.0
        %1759 = vmatprep.subr.mxu0 0.0
        %1760 = vmatpush1.msra.mxu0 0.0
        %1761 = vmatprep.subr.mxu0 %v1725
        %1762 = vmatpush1.msra.mxu0 %v1724
        %1763 = vmatprep.subr.mxu0 %v1723
        %1764 = vmatpush1.msra.mxu0 %v1722
        %1765 = vmatprep.subr.mxu0 %v1721
        %1766 = vmatpush1.msra.mxu0 %v1720
        %1767 = vmatprep.subr.mxu0 %v1719
        %1768 = vmatpush1.msra.mxu0 %v1718
        %1769 = vmatprep.subr.mxu0 0.0
        %1770 = vmatpush2.msra.mxu0 0.0
        %1771 = vmatprep.subr.mxu0 0.0
        %1772 = vmatpush2.msra.mxu0 0.0
        %1773 = vmatprep.subr.mxu0 0.0
        %1774 = vmatpush2.msra.mxu0 0.0
        %1775 = vmatprep.subr.mxu0 0.0
        %1776 = vmatpush2.msra.mxu0 0.0
        %1777 = vmatprep.subr.mxu0 0.0
        %1778 = vmatpush2.msra.mxu0 0.0
        %1779 = vmatprep.subr.mxu0 0.0
        %1780 = vmatpush2.msra.mxu0 0.0
        %1781 = vmatprep.subr.mxu0 0.0
        %1782 = vmatpush2.msra.mxu0 0.0
        %1783 = vmatprep.subr.mxu0 0.0
        %1784 = vmatpush2.msra.mxu0 0.0
        %1785 = vmatprep.subr.mxu0 0.0
        %1786 = vmatpush2.msra.mxu0 0.0
        %1787 = vmatprep.subr.mxu0 0.0
        %1788 = vmatpush2.msra.mxu0 0.0
        %1789 = vmatprep.subr.mxu0 0.0
        %1790 = vmatpush2.msra.mxu0 0.0
        %1791 = vmatprep.subr.mxu0 0.0
        %1792 = vmatpush2.msra.mxu0 0.0
        %1793 = vmatprep.subr.mxu0 0.0
        %1794 = vmatpush2.msra.mxu0 0.0
        %1795 = vmatprep.subr.mxu0 0.0
        %1796 = vmatpush2.msra.mxu0 0.0
        %1797 = vmatprep.subr.mxu0 0.0
        %1798 = vmatpush2.msra.mxu0 0.0
        %1799 = vmatprep.subr.mxu0 0.0
        %1800 = vmatpush2.msra.mxu0 0.0
        %1801 = vmatprep.mubr.f32.mxu0 0.0
        %1802 = vmatmul.mubr.f32.gmra.mxu0 %v1735
        %v1803 = vpop.f32.mrf.mxu0
        %v1804 = vadd.f32 %v1731, %v1803
        %v1805 = vpop.f32.mrf.mxu0
        %v1806 = vadd.f32 %v1731, %v1805
        %1807 = vdwg.mxu0
        %v1808 = vld [vmem:[%s9] sm:$0xff]
        %1810 = vset.pattern.permute.xlu0 0
        %1811 = vperm.xlu0 %1810, %v1808
        %v1812 = vpop.permute.xlu0 %1811
        %v1814 = vmul.f32 %v1804, %v1812
        %v1815 = vmul.f32 %v1806, %v1812
        %v1816 = vadd.f32 %v358, %v1814
        %v1817 = vadd.f32 %v359, %v1815
        %1818 = vst [vmem:[%s352] sm:$0xff] %v1816
        %1819 = vst [vmem:[%s352 + $0x8] sm:$0xff] %v1817
        %s1820 = sand.u32 %s247, 1
        %s1821 = scalar_lea.sflag [#allocation4], %s1820
        %s1822 = sand.u32 %s247, 1
        %s1823 = smul.addr %s1822, 16
        %s1824 = scalar_lea.vmem [#allocation3], %s1823
        // Predicated region
        $region61: #{tpu_custom_call.1} parent=59 // pred_check
          %p1825 = pneg %p257
        $region62: #{tpu_custom_call.1} parent=59 // pred_check_branch
          %1827 = sbr.rel (%p1825) target = $region64
        $region63: #{tpu_custom_call.1} parent=59 // pred_region
          %s1829 = ssub.s32 256, 256
          %1830 = vsyncadd %s1821, %s1829
          %s1831 = smul.addr %s24, 2
          %s1832 = smul.addr %s1831, 128
          %s1833 = scalar_lea.hbm %s10, %s1832
          %s1835 = sshll.u32 %s1824, 4
          %s1836 = int_to_ptr.vmem [resolvable:$true] %s1835
          %1838 = dma.vmem_to_hbm [thread:$0]  %s1836, 256, %s1833, %s1821
        $region64: #{tpu_custom_call.1} parent=59 // pred_fallthru
          _
      $region60: #{tpu_custom_call.1} parent=5 // pred_fallthru
        _
      %p1839 = scmp.le.s32.totalorder 2, %s19
      // Predicated region
      $region65: #{tpu_custom_call.1} parent=5 // pred_check
        %p1840 = pneg %p1839
      $region66: #{tpu_custom_call.1} parent=5 // pred_check_branch
        %1842 = sbr.rel (%p1840) target = $region68
      $region67: #{tpu_custom_call.1} parent=5 // pred_region
        %s1843 = ssub.s32 %s19, 2
        // Predicated region
        $region69: #{tpu_custom_call.1} parent=67 // pred_check
          %p1844 = pneg %p263
        $region70: #{tpu_custom_call.1} parent=67 // pred_check_branch
          %1846 = sbr.rel (%p1844) target = $region72
        $region71: #{tpu_custom_call.1} parent=67 // pred_region
          %s1847 = sand.u32 %s248, 1
          %s1848 = scalar_lea.sflag [#allocation4], %s1847
          %s1849 = sand.u32 %s248, 1
          %s1850 = smul.addr %s1849, 16
          %s1851 = scalar_lea.vmem [#allocation3], %s1850
          %1852 = dma.done %s1848, 256
        $region72: #{tpu_custom_call.1} parent=67 // pred_fallthru
          _
      $region68: #{tpu_custom_call.1} parent=5 // pred_fallthru
        _
    $region6: #{tpu_custom_call.1} parent=1 // loop_footer
      %s23 = sadd.s32 1, %s19
    $region7: #{tpu_custom_call.1} parent=1 // loop_footer_branch
      %18 = sbr.rel target = $region3
    $region8: #{tpu_custom_call.1} parent=1 // loop_exit
      _
    %1853 = vsyncpa [#allocation4], 1
    %s1854 = scalar_lea.sflag [#allocation4], 1
    %1855 = vsyncpa %s1854, 1

</llo_original>
